<compile_context>
chip_gen: v5e
topology: v5e:2x2
jax: 0.10.0
libtpu: 0.0.40
codegen_flags: <defaults>
</compile_context>

<pallas_src>
import functools
import math

import jax
import jax.numpy as jnp
from jax import lax
from jax.experimental import pallas as pl
from jax.experimental.pallas import tpu as pltpu

_VMEM_LIMIT = 32 * 1024 * 1024   # conservative: fits v5e/v6e scoped default and v7x
_LANES = 128
_EPS = 1e-5


def _round_up(x, m):
    return (x + m - 1) // m * m


# ---------------------------------------------------------------------------
# Pallas kernels
# ---------------------------------------------------------------------------
def _matmul_stats_kernel(p_ref, w_ref, y_ref, sum_ref, sq_ref):
    """Phase 1: y = patches @ W (bf16 operands, f32 accumulate) for this M-tile,
    plus per-channel sum / sum-of-squares accumulated across the grid axis."""
    @pl.when(pl.program_id(0) == 0)
    def _():
        sum_ref[...] = jnp.zeros_like(sum_ref)
        sq_ref[...] = jnp.zeros_like(sq_ref)

    y = jnp.dot(p_ref[...], w_ref[...], preferred_element_type=jnp.float32)
    y_ref[...] = y
    sum_ref[...] += jnp.sum(y, axis=0, keepdims=True)
    sq_ref[...] += jnp.sum(y * y, axis=0, keepdims=True)


def _bn_lrelu_kernel(y_ref, sum_ref, sq_ref, g_ref, beta_ref, o_ref, *, inv_m):
    """Phase 2: training-mode BatchNorm (biased variance) + LeakyReLU(0.2)."""
    mean = sum_ref[...] * inv_m
    var = sq_ref[...] * inv_m - mean * mean
    var = jnp.maximum(var, 0.0)           # guard E[x^2]-E[x]^2 cancellation
    scale = lax.rsqrt(var + _EPS) * g_ref[...]
    shift = beta_ref[...] - mean * scale
    yn = y_ref[...] * scale + shift
    o_ref[...] = jnp.where(yn > 0, yn, 0.2 * yn)


def _matmul_bias_sigmoid_kernel(p_ref, w_ref, b_ref, o_ref):
    y = jnp.dot(p_ref[...], w_ref[...], preferred_element_type=jnp.float32)
    y = y + b_ref[...]
    o_ref[...] = 1.0 / (1.0 + jnp.exp(-y))


# ---------------------------------------------------------------------------
# Glue: NHWC im2col + pallas_call wrappers
# ---------------------------------------------------------------------------
def _im2col_nhwc(x, k, stride, pad):
    """x: (N, H, W, C) -> patches (N*OH*OW, k*k*C), flattened in (kh, kw, C) order."""
    N, H, W, C = x.shape
    xp = jnp.pad(x, ((0, 0), (pad, pad), (pad, pad), (0, 0)))
    OH = (H + 2 * pad - k) // stride + 1
    OW = (W + 2 * pad - k) // stride + 1
    cols = []
    for i in range(k):
        for j in range(k):
            cols.append(xp[:, i:i + stride * OH:stride, j:j + stride * OW:stride, :])
    p = jnp.stack(cols, axis=3)                     # (N, OH, OW, k*k, C)
    return p.reshape(N * OH * OW, k * k * C), OH, OW


def _weight_matrix(w, o_pad):
    """PyTorch (O, C, kh, kw) -> (kh*kw*C, O_pad) bf16, zero-padded output channels."""
    O, C, kh, kw = w.shape
    wm = jnp.transpose(w, (2, 3, 1, 0)).reshape(kh * kw * C, O)
    return jnp.pad(wm, ((0, 0), (0, o_pad - O))).astype(jnp.bfloat16)


def _choose_tm(m, k, o_pad):
    """Largest M-tile (<=512 rows, multiple of 16) whose double-buffered bf16 patch
    tile + f32 y tile stay well under the VMEM budget on all generations."""
    tm = 512
    while tm > 16 and 2 * (tm * k * 2 + tm * o_pad * 4) > 8 * 1024 * 1024:
        tm //= 2
    return min(tm, _round_up(max(m, 1), 16))


def _mosaic_params(semantics):
    return pltpu.CompilerParams(dimension_semantics=semantics,
                                vmem_limit_bytes=_VMEM_LIMIT)


def conv_bn_lrelu(x, w, gamma, beta, stride, pad):
    """x: (N, H, W, C) NHWC.  Conv2d(4x4) -> train-mode BatchNorm -> LeakyReLU(0.2).
    The conv bias is omitted: BatchNorm's mean subtraction cancels it exactly."""
    N = x.shape[0]
    O, C, k, _ = w.shape
    patches, OH, OW = _im2col_nhwc(x, k, stride, pad)
    M, K = patches.shape
    O_pad = _round_up(O, _LANES)
    TM = _choose_tm(M, K, O_pad)
    M_pad = _round_up(M, TM)
    num_m = M_pad // TM

    # Zero-padded rows contribute 0 to both sums, so stats over the real M stay exact.
    patches = jnp.pad(patches, ((0, M_pad - M), (0, 0))).astype(jnp.bfloat16)
    wm = _weight_matrix(w, O_pad)
    g = jnp.pad(gamma, (0, O_pad - O), constant_values=1.0).reshape(1, O_pad)
    bt = jnp.pad(beta, (0, O_pad - O)).reshape(1, O_pad)

    vec_spec = pl.BlockSpec((1, O_pad), lambda i: (0, 0))

    # Phase 1: tiled matmul + per-channel sum / sum-of-squares accumulation.
    y, ch_sum, ch_sq = pl.pallas_call(
        _matmul_stats_kernel,
        out_shape=(jax.ShapeDtypeStruct((M_pad, O_pad), jnp.float32),
                   jax.ShapeDtypeStruct((1, O_pad), jnp.float32),
                   jax.ShapeDtypeStruct((1, O_pad), jnp.float32)),
        grid=(num_m,),
        in_specs=[pl.BlockSpec((TM, K), lambda i: (i, 0)),
                  pl.BlockSpec((K, O_pad), lambda i: (0, 0))],
        out_specs=(pl.BlockSpec((TM, O_pad), lambda i: (i, 0)),
                   vec_spec, vec_spec),
        compiler_params=_mosaic_params(("arbitrary",)),
    )(patches, wm)

    # Phase 2: normalize + affine + LeakyReLU, fully parallel over M tiles.
    out = pl.pallas_call(
        functools.partial(_bn_lrelu_kernel, inv_m=1.0 / M),
        out_shape=jax.ShapeDtypeStruct((M_pad, O_pad), jnp.float32),
        grid=(num_m,),
        in_specs=[pl.BlockSpec((TM, O_pad), lambda i: (i, 0)),
                  vec_spec, vec_spec, vec_spec, vec_spec],
        out_specs=pl.BlockSpec((TM, O_pad), lambda i: (i, 0)),
        compiler_params=_mosaic_params(("parallel",)),
    )(y, ch_sum, ch_sq, g, bt)

    return out[:M, :O].reshape(N, OH, OW, O)


def conv_sigmoid(x, w, b, stride, pad):
    """x: (N, H, W, C) NHWC.  Conv2d(4x4) + bias -> Sigmoid (final layer)."""
    N = x.shape[0]
    O, C, k, _ = w.shape
    patches, OH, OW = _im2col_nhwc(x, k, stride, pad)
    M, K = patches.shape
    O_pad = _round_up(O, _LANES)
    TM = _choose_tm(M, K, O_pad)
    M_pad = _round_up(M, TM)
    num_m = M_pad // TM

    patches = jnp.pad(patches, ((0, M_pad - M), (0, 0))).astype(jnp.bfloat16)
    wm = _weight_matrix(w, O_pad)
    bp = jnp.pad(b, (0, O_pad - O)).reshape(1, O_pad)

    out = pl.pallas_call(
        _matmul_bias_sigmoid_kernel,
        out_shape=jax.ShapeDtypeStruct((M_pad, O_pad), jnp.float32),
        grid=(num_m,),
        in_specs=[pl.BlockSpec((TM, K), lambda i: (i, 0)),
                  pl.BlockSpec((K, O_pad), lambda i: (0, 0)),
                  pl.BlockSpec((1, O_pad), lambda i: (0, 0))],
        out_specs=pl.BlockSpec((TM, O_pad), lambda i: (i, 0)),
        compiler_params=_mosaic_params(("parallel",)),
    )(patches, wm, bp)

    return out[:M, :O].reshape(N, OH, OW, O)


# ---------------------------------------------------------------------------
# Parameter init (deterministic, mirrors the module's __init__ shapes)
# ---------------------------------------------------------------------------
def init_discriminator_params(key, in_channel, fmap_dim):
    depth = math.log2(fmap_dim) - 1
    if not (fmap_dim > 1 and depth.is_integer()):
        raise ValueError("fmap_dim should be a power of 2 and greater than 1")
    depth = int(depth)
    params = []
    p_val = in_channel
    for idx in range(depth):
        if idx < depth - 1:
            o_val = fmap_dim * 2 ** idx
            stride, pad, last = 2, 1, False
        else:
            o_val = 1
            stride, pad, last = 1, 0, True
        key, kw, kb = jax.random.split(key, 3)
        fan_in = p_val * 4 * 4
        bound = 1.0 / math.sqrt(fan_in)
        layer = dict(
            w=jax.random.uniform(kw, (o_val, p_val, 4, 4), jnp.float32, -bound, bound),
            b=jax.random.uniform(kb, (o_val,), jnp.float32, -bound, bound),
            stride=stride, pad=pad, last=last,
        )
        if not last:
            layer["gamma"] = jnp.ones((o_val,), jnp.float32)
            layer["beta"] = jnp.zeros((o_val,), jnp.float32)
        params.append(layer)
        p_val = o_val
    return params


def discriminator_forward(params, x_nchw):
    x = jnp.transpose(x_nchw, (0, 2, 3, 1))            # NHWC inside the network
    for layer in params:
        if layer["last"]:
            x = conv_sigmoid(x, layer["w"], layer["b"], layer["stride"], layer["pad"])
        else:
            # Conv bias not fed to the kernel: BN mean subtraction cancels it exactly.
            x = conv_bn_lrelu(x, layer["w"], layer["gamma"], layer["beta"],
                              layer["stride"], layer["pad"])
    return jnp.transpose(x, (0, 3, 1, 2))               # back to NCHW


# ---------------------------------------------------------------------------
# Pure-JAX reference (same bf16-operand / f32-accumulate convs) for sanity check
# ---------------------------------------------------------------------------
def _ref_forward(params, x):
    for layer in params:
        y = lax.conv_general_dilated(
            x.astype(jnp.bfloat16), layer["w"].astype(jnp.bfloat16),
            window_strides=(layer["stride"],) * 2,
            padding=[(layer["pad"], layer["pad"])] * 2,
            dimension_numbers=("NCHW", "OIHW", "NCHW"),
            preferred_element_type=jnp.float32)
        y = y + layer["b"].reshape(1, -1, 1, 1)
        if layer["last"]:
            x = jax.nn.sigmoid(y)
        else:
            mean = jnp.mean(y, axis=(0, 2, 3), keepdims=True)
            var = jnp.mean((y - mean) ** 2, axis=(0, 2, 3), keepdims=True)
            yn = (y - mean) * lax.rsqrt(var + 1e-5)
            yn = yn * layer["gamma"].reshape(1, -1, 1, 1) + layer["beta"].reshape(1, -1, 1, 1)
            x = jnp.where(yn > 0, yn, 0.2 * yn)
    return x


if __name__ == "__main__":
    in_channel, fmap_dim = 4, 16          # depth = 3: (4->16 s2), (16->32 s2), (32->1 s1)
    key = jax.random.PRNGKey(0)
    k_params, k_x = jax.random.split(key)
    params = init_discriminator_params(k_params, in_channel, fmap_dim)

    # Input spatial size 16 -> 8 -> 4 -> 1 (final output is (N, 1, 1, 1)).
    x = jax.random.normal(k_x, (2, in_channel, 16, 16), jnp.float32)

    fwd = jax.jit(lambda inp: discriminator_forward(params, inp))
    out = jax.block_until_ready(fwd(x))

    ref = jax.block_until_ready(_ref_forward(params, x))
    assert out.shape == (2, 1, 1, 1), out.shape
    assert jnp.allclose(out, ref, atol=2e-3, rtol=2e-3), (out, ref)

    print("KERNEL_OK")
</pallas_src>

<mosaic_0001>
module attributes {stable_mosaic.version = 11 : i64} {
  func.func @_matmul_stats_kernel(%arg0: i32, %arg1: memref<128x64xbf16, #tpu.memory_space<vmem>>, %arg2: memref<64x128xbf16, #tpu.memory_space<vmem>>, %arg3: memref<128x128xf32, #tpu.memory_space<vmem>>, %arg4: memref<1x128xf32, #tpu.memory_space<vmem>>, %arg5: memref<1x128xf32, #tpu.memory_space<vmem>>) attributes {dimension_semantics = [#tpu.dimension_semantics<arbitrary>], iteration_bounds = array<i64: 1>, scalar_prefetch = 0 : i64, scratch_operands = 0 : i64, tpu.core_type = #tpu.core_type<tc>, window_params = [{transform_indices = @transform_0, window_bounds = array<i64: 128, 64>}, {pipeline_mode = #tpu.pipeline_mode<synchronous>, transform_indices = @transform_1, window_bounds = array<i64: 64, 128>}, {transform_indices = @transform_2, window_bounds = array<i64: 128, 128>}, {pipeline_mode = #tpu.pipeline_mode<synchronous>, transform_indices = @transform_3, window_bounds = array<i64: 1, 128>}, {pipeline_mode = #tpu.pipeline_mode<synchronous>, transform_indices = @transform_4, window_bounds = array<i64: 1, 128>}]} {
    %c0_i32 = arith.constant 0 : i32
    %0 = arith.cmpi eq, %arg0, %c0_i32 : i32
    %1 = arith.extui %0 : i1 to i32
    %c0_i32_0 = arith.constant 0 : i32
    %2 = arith.cmpi ne, %1, %c0_i32_0 : i32
    scf.if %2 {
      %cst_16 = arith.constant 0.000000e+00 : f32
      %18 = vector.broadcast %cst_16 : f32 to vector<1x128xf32>
      %c0_17 = arith.constant 0 : index
      %c0_18 = arith.constant 0 : index
      %19 = vector.load %arg4[%c0_17, %c0_18] : memref<1x128xf32, #tpu.memory_space<vmem>>, vector<1x128xf32>
      tpu.vector_store %arg4[%c0_17, %c0_18], %18 {strides = array<i32>} : memref<1x128xf32, #tpu.memory_space<vmem>>, vector<1x128xf32>,
      %cst_19 = arith.constant 0.000000e+00 : f32
      %20 = vector.broadcast %cst_19 : f32 to vector<1x128xf32>
      %c0_20 = arith.constant 0 : index
      %c0_21 = arith.constant 0 : index
      %21 = vector.load %arg5[%c0_20, %c0_21] : memref<1x128xf32, #tpu.memory_space<vmem>>, vector<1x128xf32>
      tpu.vector_store %arg5[%c0_20, %c0_21], %20 {strides = array<i32>} : memref<1x128xf32, #tpu.memory_space<vmem>>, vector<1x128xf32>,
    } else {
    }
    %c0 = arith.constant 0 : index
    %c0_1 = arith.constant 0 : index
    %3 = vector.load %arg1[%c0, %c0_1] : memref<128x64xbf16, #tpu.memory_space<vmem>>, vector<128x64xbf16>
    %c0_2 = arith.constant 0 : index
    %c0_3 = arith.constant 0 : index
    %4 = vector.load %arg2[%c0_2, %c0_3] : memref<64x128xbf16, #tpu.memory_space<vmem>>, vector<64x128xbf16>
    %cst = arith.constant dense<0.000000e+00> : vector<128x128xf32>
    %5 = tpu.matmul %3, %4, %cst {dimension_numbers = #tpu.dot_dimension_numbers<[1], [0], [0], [1], [0, 0, 1, 1], [], []>} : vector<128x64xbf16>, vector<64x128xbf16>, vector<128x128xf32> -> vector<128x128xf32>
    %c0_4 = arith.constant 0 : index
    %c0_5 = arith.constant 0 : index
    %6 = vector.load %arg3[%c0_4, %c0_5] : memref<128x128xf32, #tpu.memory_space<vmem>>, vector<128x128xf32>
    tpu.vector_store %arg3[%c0_4, %c0_5], %5 {strides = array<i32>} : memref<128x128xf32, #tpu.memory_space<vmem>>, vector<128x128xf32>,
    %c0_6 = arith.constant 0 : index
    %c0_7 = arith.constant 0 : index
    %7 = vector.load %arg4[%c0_6, %c0_7] : memref<1x128xf32, #tpu.memory_space<vmem>>, vector<1x128xf32>
    %cst_8 = arith.constant dense<0.000000e+00> : vector<128xf32>
    %8 = vector.multi_reduction <add>, %5, %cst_8 [0] : vector<128x128xf32> to vector<128xf32>
    %9 = vector.shape_cast %8 : vector<128xf32> to vector<1x128xf32>
    %10 = arith.addf %7, %9 : vector<1x128xf32>
    %c0_9 = arith.constant 0 : index
    %c0_10 = arith.constant 0 : index
    %11 = vector.load %arg4[%c0_9, %c0_10] : memref<1x128xf32, #tpu.memory_space<vmem>>, vector<1x128xf32>
    tpu.vector_store %arg4[%c0_9, %c0_10], %10 {strides = array<i32>} : memref<1x128xf32, #tpu.memory_space<vmem>>, vector<1x128xf32>,
    %c0_11 = arith.constant 0 : index
    %c0_12 = arith.constant 0 : index
    %12 = vector.load %arg5[%c0_11, %c0_12] : memref<1x128xf32, #tpu.memory_space<vmem>>, vector<1x128xf32>
    %13 = arith.mulf %5, %5 : vector<128x128xf32>
    %cst_13 = arith.constant dense<0.000000e+00> : vector<128xf32>
    %14 = vector.multi_reduction <add>, %13, %cst_13 [0] : vector<128x128xf32> to vector<128xf32>
    %15 = vector.shape_cast %14 : vector<128xf32> to vector<1x128xf32>
    %16 = arith.addf %12, %15 : vector<1x128xf32>
    %c0_14 = arith.constant 0 : index
    %c0_15 = arith.constant 0 : index
    %17 = vector.load %arg5[%c0_14, %c0_15] : memref<1x128xf32, #tpu.memory_space<vmem>>, vector<1x128xf32>
    tpu.vector_store %arg5[%c0_14, %c0_15], %16 {strides = array<i32>} : memref<1x128xf32, #tpu.memory_space<vmem>>, vector<1x128xf32>,
    return
  }
  func.func @transform_0(%arg0: i32) -> (i32, i32) {
    %c0_i32 = arith.constant 0 : i32
    %c0_i32_0 = arith.constant 0 : i32
    return %arg0, %c0_i32 : i32, i32
  }
  func.func @transform_1(%arg0: i32) -> (i32, i32) {
    %c0_i32 = arith.constant 0 : i32
    %c0_i32_0 = arith.constant 0 : i32
    %c0_i32_1 = arith.constant 0 : i32
    return %c0_i32, %c0_i32_0 : i32, i32
  }
  func.func @transform_2(%arg0: i32) -> (i32, i32) {
    %c0_i32 = arith.constant 0 : i32
    %c0_i32_0 = arith.constant 0 : i32
    return %arg0, %c0_i32 : i32, i32
  }
  func.func @transform_3(%arg0: i32) -> (i32, i32) {
    %c0_i32 = arith.constant 0 : i32
    %c0_i32_0 = arith.constant 0 : i32
    %c0_i32_1 = arith.constant 0 : i32
    return %c0_i32, %c0_i32_0 : i32, i32
  }
  func.func @transform_4(%arg0: i32) -> (i32, i32) {
    %c0_i32 = arith.constant 0 : i32
    %c0_i32_0 = arith.constant 0 : i32
    %c0_i32_1 = arith.constant 0 : i32
    return %c0_i32, %c0_i32_0 : i32, i32
  }
}

module attributes {stable_mosaic.version = 11 : i64} {
  func.func @_bn_lrelu_kernel(%arg0: i32, %arg1: memref<128x128xf32, #tpu.memory_space<vmem>>, %arg2: memref<1x128xf32, #tpu.memory_space<vmem>>, %arg3: memref<1x128xf32, #tpu.memory_space<vmem>>, %arg4: memref<1x128xf32, #tpu.memory_space<vmem>>, %arg5: memref<1x128xf32, #tpu.memory_space<vmem>>, %arg6: memref<128x128xf32, #tpu.memory_space<vmem>>) attributes {dimension_semantics = [#tpu.dimension_semantics<parallel>], iteration_bounds = array<i64: 1>, scalar_prefetch = 0 : i64, scratch_operands = 0 : i64, tpu.core_type = #tpu.core_type<tc>, window_params = [{transform_indices = @transform_0, window_bounds = array<i64: 128, 128>}, {pipeline_mode = #tpu.pipeline_mode<synchronous>, transform_indices = @transform_1, window_bounds = array<i64: 1, 128>}, {pipeline_mode = #tpu.pipeline_mode<synchronous>, transform_indices = @transform_2, window_bounds = array<i64: 1, 128>}, {pipeline_mode = #tpu.pipeline_mode<synchronous>, transform_indices = @transform_3, window_bounds = array<i64: 1, 128>}, {pipeline_mode = #tpu.pipeline_mode<synchronous>, transform_indices = @transform_4, window_bounds = array<i64: 1, 128>}, {transform_indices = @transform_5, window_bounds = array<i64: 128, 128>}]} {
    %c0 = arith.constant 0 : index
    %c0_0 = arith.constant 0 : index
    %0 = vector.load %arg2[%c0, %c0_0] : memref<1x128xf32, #tpu.memory_space<vmem>>, vector<1x128xf32>
    %cst = arith.constant 7.812500e-03 : f32
    %1 = vector.broadcast %cst : f32 to vector<1x128xf32>
    %2 = arith.mulf %0, %1 : vector<1x128xf32>
    %c0_1 = arith.constant 0 : index
    %c0_2 = arith.constant 0 : index
    %3 = vector.load %arg3[%c0_1, %c0_2] : memref<1x128xf32, #tpu.memory_space<vmem>>, vector<1x128xf32>
    %cst_3 = arith.constant 7.812500e-03 : f32
    %4 = vector.broadcast %cst_3 : f32 to vector<1x128xf32>
    %5 = arith.mulf %3, %4 : vector<1x128xf32>
    %6 = arith.mulf %2, %2 : vector<1x128xf32>
    %7 = arith.subf %5, %6 : vector<1x128xf32>
    %cst_4 = arith.constant 0.000000e+00 : f32
    %8 = vector.broadcast %cst_4 : f32 to vector<1x128xf32>
    %9 = arith.maximumf %7, %8 : vector<1x128xf32>
    %cst_5 = arith.constant 9.99999974E-6 : f32
    %10 = vector.broadcast %cst_5 : f32 to vector<1x128xf32>
    %11 = arith.addf %9, %10 : vector<1x128xf32>
    %12 = math.rsqrt %11 : vector<1x128xf32>
    %c0_6 = arith.constant 0 : index
    %c0_7 = arith.constant 0 : index
    %13 = vector.load %arg4[%c0_6, %c0_7] : memref<1x128xf32, #tpu.memory_space<vmem>>, vector<1x128xf32>
    %14 = arith.mulf %12, %13 : vector<1x128xf32>
    %c0_8 = arith.constant 0 : index
    %c0_9 = arith.constant 0 : index
    %15 = vector.load %arg5[%c0_8, %c0_9] : memref<1x128xf32, #tpu.memory_space<vmem>>, vector<1x128xf32>
    %16 = arith.mulf %2, %14 : vector<1x128xf32>
    %17 = arith.subf %15, %16 : vector<1x128xf32>
    %c0_10 = arith.constant 0 : index
    %c0_11 = arith.constant 0 : index
    %18 = vector.load %arg1[%c0_10, %c0_11] : memref<128x128xf32, #tpu.memory_space<vmem>>, vector<128x128xf32>
    %19 = vector.broadcast %14 : vector<1x128xf32> to vector<128x128xf32>
    %20 = arith.mulf %18, %19 : vector<128x128xf32>
    %21 = vector.broadcast %17 : vector<1x128xf32> to vector<128x128xf32>
    %22 = arith.addf %20, %21 : vector<128x128xf32>
    %cst_12 = arith.constant 0.000000e+00 : f32
    %23 = vector.broadcast %cst_12 : f32 to vector<128x128xf32>
    %24 = arith.cmpf ogt, %22, %23 : vector<128x128xf32>
    %cst_13 = arith.constant 2.000000e-01 : f32
    %25 = vector.broadcast %cst_13 : f32 to vector<128x128xf32>
    %26 = arith.mulf %25, %22 : vector<128x128xf32>
    %27 = arith.select %24, %22, %26 : vector<128x128xi1>, vector<128x128xf32>
    %c0_14 = arith.constant 0 : index
    %c0_15 = arith.constant 0 : index
    %28 = vector.load %arg6[%c0_14, %c0_15] : memref<128x128xf32, #tpu.memory_space<vmem>>, vector<128x128xf32>
    tpu.vector_store %arg6[%c0_14, %c0_15], %27 {strides = array<i32>} : memref<128x128xf32, #tpu.memory_space<vmem>>, vector<128x128xf32>,
    return
  }
  func.func @transform_0(%arg0: i32) -> (i32, i32) {
    %c0_i32 = arith.constant 0 : i32
    %c0_i32_0 = arith.constant 0 : i32
    return %arg0, %c0_i32 : i32, i32
  }
  func.func @transform_1(%arg0: i32) -> (i32, i32) {
    %c0_i32 = arith.constant 0 : i32
    %c0_i32_0 = arith.constant 0 : i32
    %c0_i32_1 = arith.constant 0 : i32
    return %c0_i32, %c0_i32_0 : i32, i32
  }
  func.func @transform_2(%arg0: i32) -> (i32, i32) {
    %c0_i32 = arith.constant 0 : i32
    %c0_i32_0 = arith.constant 0 : i32
    %c0_i32_1 = arith.constant 0 : i32
    return %c0_i32, %c0_i32_0 : i32, i32
  }
  func.func @transform_3(%arg0: i32) -> (i32, i32) {
    %c0_i32 = arith.constant 0 : i32
    %c0_i32_0 = arith.constant 0 : i32
    %c0_i32_1 = arith.constant 0 : i32
    return %c0_i32, %c0_i32_0 : i32, i32
  }
  func.func @transform_4(%arg0: i32) -> (i32, i32) {
    %c0_i32 = arith.constant 0 : i32
    %c0_i32_0 = arith.constant 0 : i32
    %c0_i32_1 = arith.constant 0 : i32
    return %c0_i32, %c0_i32_0 : i32, i32
  }
  func.func @transform_5(%arg0: i32) -> (i32, i32) {
    %c0_i32 = arith.constant 0 : i32
    %c0_i32_0 = arith.constant 0 : i32
    return %arg0, %c0_i32 : i32, i32
  }
}

module attributes {stable_mosaic.version = 11 : i64} {
  func.func @_matmul_stats_kernel(%arg0: i32, %arg1: memref<32x256xbf16, #tpu.memory_space<vmem>>, %arg2: memref<256x128xbf16, #tpu.memory_space<vmem>>, %arg3: memref<32x128xf32, #tpu.memory_space<vmem>>, %arg4: memref<1x128xf32, #tpu.memory_space<vmem>>, %arg5: memref<1x128xf32, #tpu.memory_space<vmem>>) attributes {dimension_semantics = [#tpu.dimension_semantics<arbitrary>], iteration_bounds = array<i64: 1>, scalar_prefetch = 0 : i64, scratch_operands = 0 : i64, tpu.core_type = #tpu.core_type<tc>, window_params = [{transform_indices = @transform_0, window_bounds = array<i64: 32, 256>}, {pipeline_mode = #tpu.pipeline_mode<synchronous>, transform_indices = @transform_1, window_bounds = array<i64: 256, 128>}, {transform_indices = @transform_2, window_bounds = array<i64: 32, 128>}, {pipeline_mode = #tpu.pipeline_mode<synchronous>, transform_indices = @transform_3, window_bounds = array<i64: 1, 128>}, {pipeline_mode = #tpu.pipeline_mode<synchronous>, transform_indices = @transform_4, window_bounds = array<i64: 1, 128>}]} {
    %c0_i32 = arith.constant 0 : i32
    %0 = arith.cmpi eq, %arg0, %c0_i32 : i32
    %1 = arith.extui %0 : i1 to i32
    %c0_i32_0 = arith.constant 0 : i32
    %2 = arith.cmpi ne, %1, %c0_i32_0 : i32
    scf.if %2 {
      %cst_16 = arith.constant 0.000000e+00 : f32
      %18 = vector.broadcast %cst_16 : f32 to vector<1x128xf32>
      %c0_17 = arith.constant 0 : index
      %c0_18 = arith.constant 0 : index
      %19 = vector.load %arg4[%c0_17, %c0_18] : memref<1x128xf32, #tpu.memory_space<vmem>>, vector<1x128xf32>
      tpu.vector_store %arg4[%c0_17, %c0_18], %18 {strides = array<i32>} : memref<1x128xf32, #tpu.memory_space<vmem>>, vector<1x128xf32>,
      %cst_19 = arith.constant 0.000000e+00 : f32
      %20 = vector.broadcast %cst_19 : f32 to vector<1x128xf32>
      %c0_20 = arith.constant 0 : index
      %c0_21 = arith.constant 0 : index
      %21 = vector.load %arg5[%c0_20, %c0_21] : memref<1x128xf32, #tpu.memory_space<vmem>>, vector<1x128xf32>
      tpu.vector_store %arg5[%c0_20, %c0_21], %20 {strides = array<i32>} : memref<1x128xf32, #tpu.memory_space<vmem>>, vector<1x128xf32>,
    } else {
    }
    %c0 = arith.constant 0 : index
    %c0_1 = arith.constant 0 : index
    %3 = vector.load %arg1[%c0, %c0_1] : memref<32x256xbf16, #tpu.memory_space<vmem>>, vector<32x256xbf16>
    %c0_2 = arith.constant 0 : index
    %c0_3 = arith.constant 0 : index
    %4 = vector.load %arg2[%c0_2, %c0_3] : memref<256x128xbf16, #tpu.memory_space<vmem>>, vector<256x128xbf16>
    %cst = arith.constant dense<0.000000e+00> : vector<32x128xf32>
    %5 = tpu.matmul %3, %4, %cst {dimension_numbers = #tpu.dot_dimension_numbers<[1], [0], [0], [1], [0, 0, 1, 1], [], []>} : vector<32x256xbf16>, vector<256x128xbf16>, vector<32x128xf32> -> vector<32x128xf32>
    %c0_4 = arith.constant 0 : index
    %c0_5 = arith.constant 0 : index
    %6 = vector.load %arg3[%c0_4, %c0_5] : memref<32x128xf32, #tpu.memory_space<vmem>>, vector<32x128xf32>
    tpu.vector_store %arg3[%c0_4, %c0_5], %5 {strides = array<i32>} : memref<32x128xf32, #tpu.memory_space<vmem>>, vector<32x128xf32>,
    %c0_6 = arith.constant 0 : index
    %c0_7 = arith.constant 0 : index
    %7 = vector.load %arg4[%c0_6, %c0_7] : memref<1x128xf32, #tpu.memory_space<vmem>>, vector<1x128xf32>
    %cst_8 = arith.constant dense<0.000000e+00> : vector<128xf32>
    %8 = vector.multi_reduction <add>, %5, %cst_8 [0] : vector<32x128xf32> to vector<128xf32>
    %9 = vector.shape_cast %8 : vector<128xf32> to vector<1x128xf32>
    %10 = arith.addf %7, %9 : vector<1x128xf32>
    %c0_9 = arith.constant 0 : index
    %c0_10 = arith.constant 0 : index
    %11 = vector.load %arg4[%c0_9, %c0_10] : memref<1x128xf32, #tpu.memory_space<vmem>>, vector<1x128xf32>
    tpu.vector_store %arg4[%c0_9, %c0_10], %10 {strides = array<i32>} : memref<1x128xf32, #tpu.memory_space<vmem>>, vector<1x128xf32>,
    %c0_11 = arith.constant 0 : index
    %c0_12 = arith.constant 0 : index
    %12 = vector.load %arg5[%c0_11, %c0_12] : memref<1x128xf32, #tpu.memory_space<vmem>>, vector<1x128xf32>
    %13 = arith.mulf %5, %5 : vector<32x128xf32>
    %cst_13 = arith.constant dense<0.000000e+00> : vector<128xf32>
    %14 = vector.multi_reduction <add>, %13, %cst_13 [0] : vector<32x128xf32> to vector<128xf32>
    %15 = vector.shape_cast %14 : vector<128xf32> to vector<1x128xf32>
    %16 = arith.addf %12, %15 : vector<1x128xf32>
    %c0_14 = arith.constant 0 : index
    %c0_15 = arith.constant 0 : index
    %17 = vector.load %arg5[%c0_14, %c0_15] : memref<1x128xf32, #tpu.memory_space<vmem>>, vector<1x128xf32>
    tpu.vector_store %arg5[%c0_14, %c0_15], %16 {strides = array<i32>} : memref<1x128xf32, #tpu.memory_space<vmem>>, vector<1x128xf32>,
    return
  }
  func.func @transform_0(%arg0: i32) -> (i32, i32) {
    %c0_i32 = arith.constant 0 : i32
    %c0_i32_0 = arith.constant 0 : i32
    return %arg0, %c0_i32 : i32, i32
  }
  func.func @transform_1(%arg0: i32) -> (i32, i32) {
    %c0_i32 = arith.constant 0 : i32
    %c0_i32_0 = arith.constant 0 : i32
    %c0_i32_1 = arith.constant 0 : i32
    return %c0_i32, %c0_i32_0 : i32, i32
  }
  func.func @transform_2(%arg0: i32) -> (i32, i32) {
    %c0_i32 = arith.constant 0 : i32
    %c0_i32_0 = arith.constant 0 : i32
    return %arg0, %c0_i32 : i32, i32
  }
  func.func @transform_3(%arg0: i32) -> (i32, i32) {
    %c0_i32 = arith.constant 0 : i32
    %c0_i32_0 = arith.constant 0 : i32
    %c0_i32_1 = arith.constant 0 : i32
    return %c0_i32, %c0_i32_0 : i32, i32
  }
  func.func @transform_4(%arg0: i32) -> (i32, i32) {
    %c0_i32 = arith.constant 0 : i32
    %c0_i32_0 = arith.constant 0 : i32
    %c0_i32_1 = arith.constant 0 : i32
    return %c0_i32, %c0_i32_0 : i32, i32
  }
}

module attributes {stable_mosaic.version = 11 : i64} {
  func.func @_bn_lrelu_kernel(%arg0: i32, %arg1: memref<32x128xf32, #tpu.memory_space<vmem>>, %arg2: memref<1x128xf32, #tpu.memory_space<vmem>>, %arg3: memref<1x128xf32, #tpu.memory_space<vmem>>, %arg4: memref<1x128xf32, #tpu.memory_space<vmem>>, %arg5: memref<1x128xf32, #tpu.memory_space<vmem>>, %arg6: memref<32x128xf32, #tpu.memory_space<vmem>>) attributes {dimension_semantics = [#tpu.dimension_semantics<parallel>], iteration_bounds = array<i64: 1>, scalar_prefetch = 0 : i64, scratch_operands = 0 : i64, tpu.core_type = #tpu.core_type<tc>, window_params = [{transform_indices = @transform_0, window_bounds = array<i64: 32, 128>}, {pipeline_mode = #tpu.pipeline_mode<synchronous>, transform_indices = @transform_1, window_bounds = array<i64: 1, 128>}, {pipeline_mode = #tpu.pipeline_mode<synchronous>, transform_indices = @transform_2, window_bounds = array<i64: 1, 128>}, {pipeline_mode = #tpu.pipeline_mode<synchronous>, transform_indices = @transform_3, window_bounds = array<i64: 1, 128>}, {pipeline_mode = #tpu.pipeline_mode<synchronous>, transform_indices = @transform_4, window_bounds = array<i64: 1, 128>}, {transform_indices = @transform_5, window_bounds = array<i64: 32, 128>}]} {
    %c0 = arith.constant 0 : index
    %c0_0 = arith.constant 0 : index
    %0 = vector.load %arg2[%c0, %c0_0] : memref<1x128xf32, #tpu.memory_space<vmem>>, vector<1x128xf32>
    %cst = arith.constant 3.125000e-02 : f32
    %1 = vector.broadcast %cst : f32 to vector<1x128xf32>
    %2 = arith.mulf %0, %1 : vector<1x128xf32>
    %c0_1 = arith.constant 0 : index
    %c0_2 = arith.constant 0 : index
    %3 = vector.load %arg3[%c0_1, %c0_2] : memref<1x128xf32, #tpu.memory_space<vmem>>, vector<1x128xf32>
    %cst_3 = arith.constant 3.125000e-02 : f32
    %4 = vector.broadcast %cst_3 : f32 to vector<1x128xf32>
    %5 = arith.mulf %3, %4 : vector<1x128xf32>
    %6 = arith.mulf %2, %2 : vector<1x128xf32>
    %7 = arith.subf %5, %6 : vector<1x128xf32>
    %cst_4 = arith.constant 0.000000e+00 : f32
    %8 = vector.broadcast %cst_4 : f32 to vector<1x128xf32>
    %9 = arith.maximumf %7, %8 : vector<1x128xf32>
    %cst_5 = arith.constant 9.99999974E-6 : f32
    %10 = vector.broadcast %cst_5 : f32 to vector<1x128xf32>
    %11 = arith.addf %9, %10 : vector<1x128xf32>
    %12 = math.rsqrt %11 : vector<1x128xf32>
    %c0_6 = arith.constant 0 : index
    %c0_7 = arith.constant 0 : index
    %13 = vector.load %arg4[%c0_6, %c0_7] : memref<1x128xf32, #tpu.memory_space<vmem>>, vector<1x128xf32>
    %14 = arith.mulf %12, %13 : vector<1x128xf32>
    %c0_8 = arith.constant 0 : index
    %c0_9 = arith.constant 0 : index
    %15 = vector.load %arg5[%c0_8, %c0_9] : memref<1x128xf32, #tpu.memory_space<vmem>>, vector<1x128xf32>
    %16 = arith.mulf %2, %14 : vector<1x128xf32>
    %17 = arith.subf %15, %16 : vector<1x128xf32>
    %c0_10 = arith.constant 0 : index
    %c0_11 = arith.constant 0 : index
    %18 = vector.load %arg1[%c0_10, %c0_11] : memref<32x128xf32, #tpu.memory_space<vmem>>, vector<32x128xf32>
    %19 = vector.broadcast %14 : vector<1x128xf32> to vector<32x128xf32>
    %20 = arith.mulf %18, %19 : vector<32x128xf32>
    %21 = vector.broadcast %17 : vector<1x128xf32> to vector<32x128xf32>
    %22 = arith.addf %20, %21 : vector<32x128xf32>
    %cst_12 = arith.constant 0.000000e+00 : f32
    %23 = vector.broadcast %cst_12 : f32 to vector<32x128xf32>
    %24 = arith.cmpf ogt, %22, %23 : vector<32x128xf32>
    %cst_13 = arith.constant 2.000000e-01 : f32
    %25 = vector.broadcast %cst_13 : f32 to vector<32x128xf32>
    %26 = arith.mulf %25, %22 : vector<32x128xf32>
    %27 = arith.select %24, %22, %26 : vector<32x128xi1>, vector<32x128xf32>
    %c0_14 = arith.constant 0 : index
    %c0_15 = arith.constant 0 : index
    %28 = vector.load %arg6[%c0_14, %c0_15] : memref<32x128xf32, #tpu.memory_space<vmem>>, vector<32x128xf32>
    tpu.vector_store %arg6[%c0_14, %c0_15], %27 {strides = array<i32>} : memref<32x128xf32, #tpu.memory_space<vmem>>, vector<32x128xf32>,
    return
  }
  func.func @transform_0(%arg0: i32) -> (i32, i32) {
    %c0_i32 = arith.constant 0 : i32
    %c0_i32_0 = arith.constant 0 : i32
    return %arg0, %c0_i32 : i32, i32
  }
  func.func @transform_1(%arg0: i32) -> (i32, i32) {
    %c0_i32 = arith.constant 0 : i32
    %c0_i32_0 = arith.constant 0 : i32
    %c0_i32_1 = arith.constant 0 : i32
    return %c0_i32, %c0_i32_0 : i32, i32
  }
  func.func @transform_2(%arg0: i32) -> (i32, i32) {
    %c0_i32 = arith.constant 0 : i32
    %c0_i32_0 = arith.constant 0 : i32
    %c0_i32_1 = arith.constant 0 : i32
    return %c0_i32, %c0_i32_0 : i32, i32
  }
  func.func @transform_3(%arg0: i32) -> (i32, i32) {
    %c0_i32 = arith.constant 0 : i32
    %c0_i32_0 = arith.constant 0 : i32
    %c0_i32_1 = arith.constant 0 : i32
    return %c0_i32, %c0_i32_0 : i32, i32
  }
  func.func @transform_4(%arg0: i32) -> (i32, i32) {
    %c0_i32 = arith.constant 0 : i32
    %c0_i32_0 = arith.constant 0 : i32
    %c0_i32_1 = arith.constant 0 : i32
    return %c0_i32, %c0_i32_0 : i32, i32
  }
  func.func @transform_5(%arg0: i32) -> (i32, i32) {
    %c0_i32 = arith.constant 0 : i32
    %c0_i32_0 = arith.constant 0 : i32
    return %arg0, %c0_i32 : i32, i32
  }
}

module attributes {stable_mosaic.version = 11 : i64} {
  func.func @_matmul_bias_sigmoid_kernel(%arg0: i32, %arg1: memref<16x512xbf16, #tpu.memory_space<vmem>>, %arg2: memref<512x128xbf16, #tpu.memory_space<vmem>>, %arg3: memref<1x128xf32, #tpu.memory_space<vmem>>, %arg4: memref<16x128xf32, #tpu.memory_space<vmem>>) attributes {dimension_semantics = [#tpu.dimension_semantics<parallel>], iteration_bounds = array<i64: 1>, scalar_prefetch = 0 : i64, scratch_operands = 0 : i64, tpu.core_type = #tpu.core_type<tc>, window_params = [{transform_indices = @transform_0, window_bounds = array<i64: 16, 512>}, {pipeline_mode = #tpu.pipeline_mode<synchronous>, transform_indices = @transform_1, window_bounds = array<i64: 512, 128>}, {pipeline_mode = #tpu.pipeline_mode<synchronous>, transform_indices = @transform_2, window_bounds = array<i64: 1, 128>}, {transform_indices = @transform_3, window_bounds = array<i64: 16, 128>}]} {
    %c0 = arith.constant 0 : index
    %c0_0 = arith.constant 0 : index
    %0 = vector.load %arg1[%c0, %c0_0] : memref<16x512xbf16, #tpu.memory_space<vmem>>, vector<16x512xbf16>
    %c0_1 = arith.constant 0 : index
    %c0_2 = arith.constant 0 : index
    %1 = vector.load %arg2[%c0_1, %c0_2] : memref<512x128xbf16, #tpu.memory_space<vmem>>, vector<512x128xbf16>
    %cst = arith.constant dense<0.000000e+00> : vector<16x128xf32>
    %2 = tpu.matmul %0, %1, %cst {dimension_numbers = #tpu.dot_dimension_numbers<[1], [0], [0], [1], [0, 0, 1, 1], [], []>} : vector<16x512xbf16>, vector<512x128xbf16>, vector<16x128xf32> -> vector<16x128xf32>
    %c0_3 = arith.constant 0 : index
    %c0_4 = arith.constant 0 : index
    %3 = vector.load %arg3[%c0_3, %c0_4] : memref<1x128xf32, #tpu.memory_space<vmem>>, vector<1x128xf32>
    %4 = vector.broadcast %3 : vector<1x128xf32> to vector<16x128xf32>
    %5 = arith.addf %2, %4 : vector<16x128xf32>
    %cst_5 = arith.constant 0.000000e+00 : f32
    %6 = vector.broadcast %cst_5 : f32 to vector<16x128xf32>
    %7 = arith.subf %6, %5 : vector<16x128xf32>
    %8 = math.exp %7 : vector<16x128xf32>
    %cst_6 = arith.constant 1.000000e+00 : f32
    %9 = vector.broadcast %cst_6 : f32 to vector<16x128xf32>
    %10 = arith.addf %9, %8 : vector<16x128xf32>
    %cst_7 = arith.constant 1.000000e+00 : f32
    %11 = vector.broadcast %cst_7 : f32 to vector<16x128xf32>
    %12 = arith.divf %11, %10 : vector<16x128xf32>
    %c0_8 = arith.constant 0 : index
    %c0_9 = arith.constant 0 : index
    %13 = vector.load %arg4[%c0_8, %c0_9] : memref<16x128xf32, #tpu.memory_space<vmem>>, vector<16x128xf32>
    tpu.vector_store %arg4[%c0_8, %c0_9], %12 {strides = array<i32>} : memref<16x128xf32, #tpu.memory_space<vmem>>, vector<16x128xf32>,
    return
  }
  func.func @transform_0(%arg0: i32) -> (i32, i32) {
    %c0_i32 = arith.constant 0 : i32
    %c0_i32_0 = arith.constant 0 : i32
    return %arg0, %c0_i32 : i32, i32
  }
  func.func @transform_1(%arg0: i32) -> (i32, i32) {
    %c0_i32 = arith.constant 0 : i32
    %c0_i32_0 = arith.constant 0 : i32
    %c0_i32_1 = arith.constant 0 : i32
    return %c0_i32, %c0_i32_0 : i32, i32
  }
  func.func @transform_2(%arg0: i32) -> (i32, i32) {
    %c0_i32 = arith.constant 0 : i32
    %c0_i32_0 = arith.constant 0 : i32
    %c0_i32_1 = arith.constant 0 : i32
    return %c0_i32, %c0_i32_0 : i32, i32
  }
  func.func @transform_3(%arg0: i32) -> (i32, i32) {
    %c0_i32 = arith.constant 0 : i32
    %c0_i32_0 = arith.constant 0 : i32
    return %arg0, %c0_i32 : i32, i32
  }
}

</mosaic_0001>

<llo_original>
// kernel: _lambda_.6
$region0: #{_lambda_.6}
  #allocation0 [shape = 'u32[]', space=smem, size = 0x4, offset = 0x4, fixed_abs, tag = 'smem constant byte address 0x4 - core index']
  #allocation1 [shape = 'u32[72,128]{1,0:T(1,128)}', space=vmem, size = 0x9000, scoped, tag = 'internal scratch']
  %s0 = inlined_call_operand.vmem [shape: f32[128,128], index: 0, kind: input, shape index: {}]
  %s1 = inlined_call_operand.vmem [shape: f32[1,128], index: 1, kind: input, shape index: {}]
  %s2 = inlined_call_operand.vmem [shape: f32[1,128], index: 2, kind: input, shape index: {}]
  %s3 = inlined_call_operand.vmem [shape: f32[1,128], index: 3, kind: input, shape index: {}]
  %s4 = inlined_call_operand.vmem [shape: f32[1,128], index: 4, kind: input, shape index: {}]
  %s5 = inlined_call_operand.vmem [shape: f32[128,128], index: 5, kind: output, shape index: {}]
  %s6 = sld [smem:[#allocation0]]
  $region30: #{_lambda_.6} parent=0
    _
  %s8 = ssub.s32 1, %s6
  %s9 = scalar_select 0, %s8, %s6
  // Predicated region
  $region2: #{_lambda_.6} parent=0 // pred_check
    _
  $region3: #{_lambda_.6} parent=0 // pred_check_branch
    %11 = sbr.rel (0) target = $region5
  $region4: #{_lambda_.6} parent=0 // pred_region
    _
  $region5: #{_lambda_.6} parent=0 // pred_fallthru
    _
  // Predicated region
  $region6: #{_lambda_.6} parent=0 // pred_check
    _
  $region7: #{_lambda_.6} parent=0 // pred_check_branch
    %13 = sbr.rel (0) target = $region9
  $region8: #{_lambda_.6} parent=0 // pred_region
    _
  $region9: #{_lambda_.6} parent=0 // pred_fallthru
    _
  // Predicated region
  $region10: #{_lambda_.6} parent=0 // pred_check
    _
  $region11: #{_lambda_.6} parent=0 // pred_check_branch
    %15 = sbr.rel (0) target = $region13
  $region12: #{_lambda_.6} parent=0 // pred_region
    _
  $region13: #{_lambda_.6} parent=0 // pred_fallthru
    _
  // Predicated region
  $region14: #{_lambda_.6} parent=0 // pred_check
    _
  $region15: #{_lambda_.6} parent=0 // pred_check_branch
    %17 = sbr.rel (0) target = $region17
  $region16: #{_lambda_.6} parent=0 // pred_region
    _
  $region17: #{_lambda_.6} parent=0 // pred_fallthru
    _
  // Predicated region
  $region18: #{_lambda_.6} parent=0 // pred_check
    _
  $region19: #{_lambda_.6} parent=0 // pred_check_branch
    %19 = sbr.rel (0) target = $region21
  $region20: #{_lambda_.6} parent=0 // pred_region
    _
  $region21: #{_lambda_.6} parent=0 // pred_fallthru
    _
  %v20 = vld [vmem:[%s1] sm:$0x1]
  %v21 = vmul.f32 %v20, 0.0078125
  %v22 = vld [vmem:[%s2] sm:$0x1]
  %v23 = vmul.f32 %v22, 0.0078125
  %v24 = vmul.f32 %v21, %v21
  %v25 = vsub.f32 %v23, %v24
  %v26 = vmax.f32 %v25, 0.0
  %v27 = vadd.f32 %v26, 1e-05
  %v28 = vrsqrt.pop %v27
  %v29 = vmul.f32 %v28, %v27
  %v30 = vmul.f32 %v29, %v28
  %v31 = vmul.f32 0.5, %v30
  %v32 = vsub.f32 1.5, %v31
  %v33 = vmul.f32 %v28, %v32
  %vm34 = vweird.f32 %v27
  %vm35 = vweird.f32 %v28
  %vm36 = vmor %vm34, %vm35
  %v37 = vsel %vm36, %v28, %v33
  %v38 = vld [vmem:[%s3] sm:$0x1]
  %v39 = vmul.f32 %v37, %v38
  %v40 = vld [vmem:[%s4] sm:$0x1]
  %v41 = vmul.f32 %v21, %v39
  %v42 = vsub.f32 %v40, %v41
  %v43 = vld [vmem:[%s0] sm:$0xff]
  %v44 = vld [vmem:[%s0 + $0x8] sm:$0xff]
  %v45 = vld [vmem:[%s0 + $0x10] sm:$0xff]
  %v46 = vld [vmem:[%s0 + $0x18] sm:$0xff]
  %v47 = vld [vmem:[%s0 + $0x20] sm:$0xff]
  %v48 = vld [vmem:[%s0 + $0x28] sm:$0xff]
  %v49 = vld [vmem:[%s0 + $0x30] sm:$0xff]
  %v50 = vld [vmem:[%s0 + $0x38] sm:$0xff]
  %v51 = vld [vmem:[%s0 + $0x40] sm:$0xff]
  %v52 = vld [vmem:[%s0 + $0x48] sm:$0xff]
  %v53 = vld [vmem:[%s0 + $0x50] sm:$0xff]
  %v54 = vld [vmem:[%s0 + $0x58] sm:$0xff]
  %v55 = vld [vmem:[%s0 + $0x60] sm:$0xff]
  %v56 = vld [vmem:[%s0 + $0x68] sm:$0xff]
  %v57 = vld [vmem:[%s0 + $0x70] sm:$0xff]
  %v58 = vld [vmem:[%s0 + $0x78] sm:$0xff]
  %v60 = vperm.slane %v39, 0
  %v62 = vmul.f32 %v43, %v60
  %v63 = vmul.f32 %v44, %v60
  %v64 = vmul.f32 %v45, %v60
  %v65 = vmul.f32 %v46, %v60
  %v66 = vmul.f32 %v47, %v60
  %v67 = vmul.f32 %v48, %v60
  %v68 = vmul.f32 %v49, %v60
  %v69 = vmul.f32 %v50, %v60
  %v70 = vmul.f32 %v51, %v60
  %v71 = vmul.f32 %v52, %v60
  %v72 = vmul.f32 %v53, %v60
  %v73 = vmul.f32 %v54, %v60
  %v74 = vmul.f32 %v55, %v60
  %v75 = vmul.f32 %v56, %v60
  %v76 = vmul.f32 %v57, %v60
  %v77 = vmul.f32 %v58, %v60
  %v79 = vperm.slane %v42, 0
  %v81 = vadd.f32 %v62, %v79
  %v82 = vadd.f32 %v63, %v79
  %v83 = vadd.f32 %v64, %v79
  %v84 = vadd.f32 %v65, %v79
  %v85 = vadd.f32 %v66, %v79
  %v86 = vadd.f32 %v67, %v79
  %v87 = vadd.f32 %v68, %v79
  %v88 = vadd.f32 %v69, %v79
  %v89 = vadd.f32 %v70, %v79
  %v90 = vadd.f32 %v71, %v79
  %v91 = vadd.f32 %v72, %v79
  %v92 = vadd.f32 %v73, %v79
  %v93 = vadd.f32 %v74, %v79
  %v94 = vadd.f32 %v75, %v79
  %v95 = vadd.f32 %v76, %v79
  %v96 = vadd.f32 %v77, %v79
  %vm97 = vcmp.gt.f32.partialorder %v81, 0.0
  %vm98 = vcmp.gt.f32.partialorder %v82, 0.0
  %vm99 = vcmp.gt.f32.partialorder %v83, 0.0
  %vm100 = vcmp.gt.f32.partialorder %v84, 0.0
  %vm101 = vcmp.gt.f32.partialorder %v85, 0.0
  %vm102 = vcmp.gt.f32.partialorder %v86, 0.0
  %vm103 = vcmp.gt.f32.partialorder %v87, 0.0
  %vm104 = vcmp.gt.f32.partialorder %v88, 0.0
  %vm105 = vcmp.gt.f32.partialorder %v89, 0.0
  %vm106 = vcmp.gt.f32.partialorder %v90, 0.0
  %vm107 = vcmp.gt.f32.partialorder %v91, 0.0
  %vm108 = vcmp.gt.f32.partialorder %v92, 0.0
  %vm109 = vcmp.gt.f32.partialorder %v93, 0.0
  %vm110 = vcmp.gt.f32.partialorder %v94, 0.0
  %vm111 = vcmp.gt.f32.partialorder %v95, 0.0
  %vm112 = vcmp.gt.f32.partialorder %v96, 0.0
  %v113 = vmul.f32 %v81, 0.2
  %v114 = vmul.f32 %v82, 0.2
  %v115 = vmul.f32 %v83, 0.2
  %v116 = vmul.f32 %v84, 0.2
  %v117 = vmul.f32 %v85, 0.2
  %v118 = vmul.f32 %v86, 0.2
  %v119 = vmul.f32 %v87, 0.2
  %v120 = vmul.f32 %v88, 0.2
  %v121 = vmul.f32 %v89, 0.2
  %v122 = vmul.f32 %v90, 0.2
  %v123 = vmul.f32 %v91, 0.2
  %v124 = vmul.f32 %v92, 0.2
  %v125 = vmul.f32 %v93, 0.2
  %v126 = vmul.f32 %v94, 0.2
  %v127 = vmul.f32 %v95, 0.2
  %v128 = vmul.f32 %v96, 0.2
  %v129 = vsel %vm97, %v81, %v113
  %v130 = vsel %vm98, %v82, %v114
  %v131 = vsel %vm99, %v83, %v115
  %v132 = vsel %vm100, %v84, %v116
  %v133 = vsel %vm101, %v85, %v117
  %v134 = vsel %vm102, %v86, %v118
  %v135 = vsel %vm103, %v87, %v119
  %v136 = vsel %vm104, %v88, %v120
  %v137 = vsel %vm105, %v89, %v121
  %v138 = vsel %vm106, %v90, %v122
  %v139 = vsel %vm107, %v91, %v123
  %v140 = vsel %vm108, %v92, %v124
  %v141 = vsel %vm109, %v93, %v125
  %v142 = vsel %vm110, %v94, %v126
  %v143 = vsel %vm111, %v95, %v127
  %v144 = vsel %vm112, %v96, %v128
  %145 = vst [vmem:[%s5] sm:$0xff] %v129
  %146 = vst [vmem:[%s5 + $0x8] sm:$0xff] %v130
  %147 = vst [vmem:[%s5 + $0x10] sm:$0xff] %v131
  %148 = vst [vmem:[%s5 + $0x18] sm:$0xff] %v132
  %149 = vst [vmem:[%s5 + $0x20] sm:$0xff] %v133
  %150 = vst [vmem:[%s5 + $0x28] sm:$0xff] %v134
  %151 = vst [vmem:[%s5 + $0x30] sm:$0xff] %v135
  %152 = vst [vmem:[%s5 + $0x38] sm:$0xff] %v136
  %153 = vst [vmem:[%s5 + $0x40] sm:$0xff] %v137
  %154 = vst [vmem:[%s5 + $0x48] sm:$0xff] %v138
  %155 = vst [vmem:[%s5 + $0x50] sm:$0xff] %v139
  %156 = vst [vmem:[%s5 + $0x58] sm:$0xff] %v140
  %157 = vst [vmem:[%s5 + $0x60] sm:$0xff] %v141
  %158 = vst [vmem:[%s5 + $0x68] sm:$0xff] %v142
  %159 = vst [vmem:[%s5 + $0x70] sm:$0xff] %v143
  %160 = vst [vmem:[%s5 + $0x78] sm:$0xff] %v144
  // Predicated region
  $region22: #{_lambda_.6} parent=0 // pred_check
    _
  $region23: #{_lambda_.6} parent=0 // pred_check_branch
    %162 = sbr.rel (0) target = $region25
  $region24: #{_lambda_.6} parent=0 // pred_region
    _
  $region25: #{_lambda_.6} parent=0 // pred_fallthru
    _
  // Predicated region
  $region26: #{_lambda_.6} parent=0 // pred_check
    _
  $region27: #{_lambda_.6} parent=0 // pred_check_branch
    %164 = sbr.rel (0) target = $region29
  $region28: #{_lambda_.6} parent=0 // pred_region
    _
  $region29: #{_lambda_.6} parent=0 // pred_fallthru
    _

// kernel: _lambda_.5
$region0: #{_lambda_.5}
  #allocation0 [shape = 'u32[]', space=smem, size = 0x4, offset = 0x4, fixed_abs, tag = 'smem constant byte address 0x4 - core index']
  #allocation1 [shape = 'u32[72,128]{1,0:T(1,128)}', space=vmem, size = 0x9000, scoped, tag = 'internal scratch']
  %s0 = inlined_call_operand.vmem [shape: bf16[128,64], index: 0, kind: input, shape index: {}]
  %s1 = inlined_call_operand.vmem [shape: bf16[64,128], index: 1, kind: input, shape index: {}]
  %s2 = inlined_call_operand.vmem [shape: f32[128,128], index: 2, kind: output, shape index: {0}]
  %s3 = inlined_call_operand.vmem [shape: f32[1,128], index: 3, kind: output, shape index: {1}]
  %s4 = inlined_call_operand.vmem [shape: f32[1,128], index: 4, kind: output, shape index: {2}]
  %5 = xla_tuple %s2, %s3, %s4
  %s6 = sld [smem:[#allocation0]]
  $region38: #{_lambda_.5} parent=0
    _
  %s8 = ssub.s32 1, %s6
  %s9 = scalar_select 0, %s8, %s6
  // Predicated region
  $region2: #{_lambda_.5} parent=0 // pred_check
    _
  $region3: #{_lambda_.5} parent=0 // pred_check_branch
    %11 = sbr.rel (0) target = $region5
  $region4: #{_lambda_.5} parent=0 // pred_region
    _
  $region5: #{_lambda_.5} parent=0 // pred_fallthru
    _
  // Predicated region
  $region6: #{_lambda_.5} parent=0 // pred_check
    _
  $region7: #{_lambda_.5} parent=0 // pred_check_branch
    %13 = sbr.rel (0) target = $region9
  $region8: #{_lambda_.5} parent=0 // pred_region
    _
  $region9: #{_lambda_.5} parent=0 // pred_fallthru
    _
  %p15 = scmp.eq.s32.totalorder 0, 0
  // Predicated region
  $region10: #{_lambda_.5} parent=0 // pred_check
    %p16 = pneg %p15
  $region11: #{_lambda_.5} parent=0 // pred_check_branch
    %18 = sbr.rel (%p16) target = $region13
  $region12: #{_lambda_.5} parent=0 // pred_region
    %19 = vst [vmem:[%s3] sm:$0x1] 0.0
    %20 = vst [vmem:[%s4] sm:$0x1] 0.0
  $region13: #{_lambda_.5} parent=0 // pred_fallthru
    _
  %v21 = vld [vmem:[%s0] sm:$0xf]
  %v22 = vld [vmem:[%s0 + $0x4] sm:$0xf]
  %v23 = vld [vmem:[%s0 + $0x8] sm:$0xf]
  %v24 = vld [vmem:[%s0 + $0xc] sm:$0xf]
  %v25 = vld [vmem:[%s0 + $0x10] sm:$0xf]
  %v26 = vld [vmem:[%s0 + $0x14] sm:$0xf]
  %v27 = vld [vmem:[%s0 + $0x18] sm:$0xf]
  %v28 = vld [vmem:[%s0 + $0x1c] sm:$0xf]
  %v29 = vld [vmem:[%s0 + $0x20] sm:$0xf]
  %v30 = vld [vmem:[%s0 + $0x24] sm:$0xf]
  %v31 = vld [vmem:[%s0 + $0x28] sm:$0xf]
  %v32 = vld [vmem:[%s0 + $0x2c] sm:$0xf]
  %v33 = vld [vmem:[%s0 + $0x30] sm:$0xf]
  %v34 = vld [vmem:[%s0 + $0x34] sm:$0xf]
  %v35 = vld [vmem:[%s0 + $0x38] sm:$0xf]
  %v36 = vld [vmem:[%s0 + $0x3c] sm:$0xf]
  %v37 = vld [vmem:[%s1] sm:$0xf]
  %v38 = vld [vmem:[%s1 + $0x4] sm:$0xf]
  %v39 = vld [vmem:[%s1 + $0x8] sm:$0xf]
  %v40 = vld [vmem:[%s1 + $0xc] sm:$0xf]
  %v41 = vld [vmem:[%s1 + $0x10] sm:$0xf]
  %v42 = vld [vmem:[%s1 + $0x14] sm:$0xf]
  %v43 = vld [vmem:[%s1 + $0x18] sm:$0xf]
  %v44 = vld [vmem:[%s1 + $0x1c] sm:$0xf]
  %v61 = vunpack.c.l.b16 %v21
  %v62 = vunpack.c.l.b16 %v22
  %v63 = vunpack.c.l.b16 %v23
  %v64 = vunpack.c.l.b16 %v24
  %v65 = vunpack.c.l.b16 %v25
  %v66 = vunpack.c.l.b16 %v26
  %v67 = vunpack.c.l.b16 %v27
  %v68 = vunpack.c.l.b16 %v28
  %v69 = vunpack.c.l.b16 %v29
  %v70 = vunpack.c.l.b16 %v30
  %v71 = vunpack.c.l.b16 %v31
  %v72 = vunpack.c.l.b16 %v32
  %v73 = vunpack.c.l.b16 %v33
  %v74 = vunpack.c.l.b16 %v34
  %v75 = vunpack.c.l.b16 %v35
  %v76 = vunpack.c.l.b16 %v36
  %v77 = vpack.c.b16 %v62, %v61
  %v78 = vpack.c.b16 %v64, %v63
  %v79 = vpack.c.b16 %v66, %v65
  %v80 = vpack.c.b16 %v68, %v67
  %v81 = vpack.c.b16 %v70, %v69
  %v82 = vpack.c.b16 %v72, %v71
  %v83 = vpack.c.b16 %v74, %v73
  %v84 = vpack.c.b16 %v76, %v75
  %v93 = vunpack.c.l.b16 %v37
  %v94 = vunpack.c.l.b16 %v38
  %v95 = vunpack.c.l.b16 %v39
  %v96 = vunpack.c.l.b16 %v40
  %v97 = vunpack.c.l.b16 %v41
  %v98 = vunpack.c.l.b16 %v42
  %v99 = vunpack.c.l.b16 %v43
  %v100 = vunpack.c.l.b16 %v44
  %v101 = vpack.c.b16 %v94, %v93
  %v102 = vpack.c.b16 %v96, %v95
  %v103 = vpack.c.b16 %v98, %v97
  %v104 = vpack.c.b16 %v100, %v99
  %vm109 = vcmask 523264
  %v111 = vsel %vm109, %v77, 0
  %v114 = vsel %vm109, %v78, 0
  %v117 = vsel %vm109, %v79, 0
  %v120 = vsel %vm109, %v80, 0
  %v123 = vsel %vm109, %v81, 0
  %v126 = vsel %vm109, %v82, 0
  %v129 = vsel %vm109, %v83, 0
  %v132 = vsel %vm109, %v84, 0
  %134 = vmatpush.bf16.msra.mxu0 0
  %135 = vmatpush.bf16.msra.mxu0 0
  %136 = vmatpush.bf16.msra.mxu0 0
  %137 = vmatpush.bf16.msra.mxu0 0
  %138 = vmatpush.bf16.msra.mxu0 %v104
  %139 = vmatpush.bf16.msra.mxu0 %v103
  %140 = vmatpush.bf16.msra.mxu0 %v102
  %141 = vmatpush.bf16.msra.mxu0 %v101
  %142 = vmatmul.bf16.gmra.mxu0 %v111
  %v143 = vpop.f32.mrf.mxu0
  %v144 = vadd.f32 0.0, %v143
  %v145 = vpop.f32.mrf.mxu0
  %v146 = vadd.f32 0.0, %v145
  %147 = vmatmul.bf16.gmra.mxu0 %v114
  %v148 = vpop.f32.mrf.mxu0
  %v149 = vadd.f32 0.0, %v148
  %v150 = vpop.f32.mrf.mxu0
  %v151 = vadd.f32 0.0, %v150
  %152 = vmatmul.bf16.gmra.mxu0 %v117
  %v153 = vpop.f32.mrf.mxu0
  %v154 = vadd.f32 0.0, %v153
  %v155 = vpop.f32.mrf.mxu0
  %v156 = vadd.f32 0.0, %v155
  %157 = vmatmul.bf16.gmra.mxu0 %v120
  %v158 = vpop.f32.mrf.mxu0
  %v159 = vadd.f32 0.0, %v158
  %v160 = vpop.f32.mrf.mxu0
  %v161 = vadd.f32 0.0, %v160
  %162 = vmatmul.bf16.gmra.mxu0 %v123
  %v163 = vpop.f32.mrf.mxu0
  %v164 = vadd.f32 0.0, %v163
  %v165 = vpop.f32.mrf.mxu0
  %v166 = vadd.f32 0.0, %v165
  %167 = vmatmul.bf16.gmra.mxu0 %v126
  %v168 = vpop.f32.mrf.mxu0
  %v169 = vadd.f32 0.0, %v168
  %v170 = vpop.f32.mrf.mxu0
  %v171 = vadd.f32 0.0, %v170
  %172 = vmatmul.bf16.gmra.mxu0 %v129
  %v173 = vpop.f32.mrf.mxu0
  %v174 = vadd.f32 0.0, %v173
  %v175 = vpop.f32.mrf.mxu0
  %v176 = vadd.f32 0.0, %v175
  %177 = vmatmul.bf16.gmra.mxu0 %v132
  %v178 = vpop.f32.mrf.mxu0
  %v179 = vadd.f32 0.0, %v178
  %v180 = vpop.f32.mrf.mxu0
  %v181 = vadd.f32 0.0, %v180
  %182 = vdwg.mxu0
  %183 = vst [vmem:[%s2] sm:$0xff] %v144
  %184 = vst [vmem:[%s2 + $0x8] sm:$0xff] %v146
  %185 = vst [vmem:[%s2 + $0x10] sm:$0xff] %v149
  %186 = vst [vmem:[%s2 + $0x18] sm:$0xff] %v151
  %187 = vst [vmem:[%s2 + $0x20] sm:$0xff] %v154
  %188 = vst [vmem:[%s2 + $0x28] sm:$0xff] %v156
  %189 = vst [vmem:[%s2 + $0x30] sm:$0xff] %v159
  %190 = vst [vmem:[%s2 + $0x38] sm:$0xff] %v161
  %191 = vst [vmem:[%s2 + $0x40] sm:$0xff] %v164
  %192 = vst [vmem:[%s2 + $0x48] sm:$0xff] %v166
  %193 = vst [vmem:[%s2 + $0x50] sm:$0xff] %v169
  %194 = vst [vmem:[%s2 + $0x58] sm:$0xff] %v171
  %195 = vst [vmem:[%s2 + $0x60] sm:$0xff] %v174
  %196 = vst [vmem:[%s2 + $0x68] sm:$0xff] %v176
  %197 = vst [vmem:[%s2 + $0x70] sm:$0xff] %v179
  %198 = vst [vmem:[%s2 + $0x78] sm:$0xff] %v181
  %v199 = vld [vmem:[%s3] sm:$0x1]
  %v200 = vadd.f32 %v144, %v146
  %v201 = vadd.f32 %v200, %v149
  %v202 = vadd.f32 %v201, %v151
  %v203 = vadd.f32 %v202, %v154
  %v204 = vadd.f32 %v203, %v156
  %v205 = vadd.f32 %v204, %v159
  %v206 = vadd.f32 %v205, %v161
  %v207 = vadd.f32 %v206, %v164
  %v208 = vadd.f32 %v207, %v166
  %v209 = vadd.f32 %v208, %v169
  %v210 = vadd.f32 %v209, %v171
  %v211 = vadd.f32 %v210, %v174
  %v212 = vadd.f32 %v211, %v176
  %v213 = vadd.f32 %v212, %v179
  %v214 = vadd.f32 %v213, %v181
  %v215 = vrot.slane %v214, 4
  %v216 = vadd.f32 %v214, %v215
  %v217 = vrot.slane %v216, 2
  %v218 = vadd.f32 %v216, %v217
  %v219 = vrot.slane %v218, 1
  %v220 = vadd.f32 %v218, %v219
  %v221 = vadd.f32 %v199, %v220
  %222 = vst [vmem:[%s3] sm:$0x1] %v221
  %v223 = vld [vmem:[%s4] sm:$0x1]
  %v224 = vmul.f32 %v144, %v144
  %v225 = vmul.f32 %v146, %v146
  %v226 = vmul.f32 %v149, %v149
  %v227 = vmul.f32 %v151, %v151
  %v228 = vmul.f32 %v154, %v154
  %v229 = vmul.f32 %v156, %v156
  %v230 = vmul.f32 %v159, %v159
  %v231 = vmul.f32 %v161, %v161
  %v232 = vmul.f32 %v164, %v164
  %v233 = vmul.f32 %v166, %v166
  %v234 = vmul.f32 %v169, %v169
  %v235 = vmul.f32 %v171, %v171
  %v236 = vmul.f32 %v174, %v174
  %v237 = vmul.f32 %v176, %v176
  %v238 = vmul.f32 %v179, %v179
  %v239 = vmul.f32 %v181, %v181
  %v240 = vadd.f32 %v224, %v225
  %v241 = vadd.f32 %v240, %v226
  %v242 = vadd.f32 %v241, %v227
  %v243 = vadd.f32 %v242, %v228
  %v244 = vadd.f32 %v243, %v229
  %v245 = vadd.f32 %v244, %v230
  %v246 = vadd.f32 %v245, %v231
  %v247 = vadd.f32 %v246, %v232
  %v248 = vadd.f32 %v247, %v233
  %v249 = vadd.f32 %v248, %v234
  %v250 = vadd.f32 %v249, %v235
  %v251 = vadd.f32 %v250, %v236
  %v252 = vadd.f32 %v251, %v237
  %v253 = vadd.f32 %v252, %v238
  %v254 = vadd.f32 %v253, %v239
  %v255 = vrot.slane %v254, 4
  %v256 = vadd.f32 %v254, %v255
  %v257 = vrot.slane %v256, 2
  %v258 = vadd.f32 %v256, %v257
  %v259 = vrot.slane %v258, 1
  %v260 = vadd.f32 %v258, %v259
  %v261 = vadd.f32 %v223, %v260
  %262 = vst [vmem:[%s4] sm:$0x1] %v261
  // Predicated region
  $region14: #{_lambda_.5} parent=0 // pred_check
    _
  $region15: #{_lambda_.5} parent=0 // pred_check_branch
    %264 = sbr.rel (0) target = $region17
  $region16: #{_lambda_.5} parent=0 // pred_region
    _
  $region17: #{_lambda_.5} parent=0 // pred_fallthru
    _
  // Predicated region
  $region18: #{_lambda_.5} parent=0 // pred_check
    _
  $region19: #{_lambda_.5} parent=0 // pred_check_branch
    %266 = sbr.rel (0) target = $region21
  $region20: #{_lambda_.5} parent=0 // pred_region
    _
  $region21: #{_lambda_.5} parent=0 // pred_fallthru
    _
  // Predicated region
  $region22: #{_lambda_.5} parent=0 // pred_check
    _
  $region23: #{_lambda_.5} parent=0 // pred_check_branch
    %268 = sbr.rel (0) target = $region25
  $region24: #{_lambda_.5} parent=0 // pred_region
    _
  $region25: #{_lambda_.5} parent=0 // pred_fallthru
    _
  // Predicated region
  $region26: #{_lambda_.5} parent=0 // pred_check
    _
  $region27: #{_lambda_.5} parent=0 // pred_check_branch
    %270 = sbr.rel (0) target = $region29
  $region28: #{_lambda_.5} parent=0 // pred_region
    _
  $region29: #{_lambda_.5} parent=0 // pred_fallthru
    _
  // Predicated region
  $region30: #{_lambda_.5} parent=0 // pred_check
    _
  $region31: #{_lambda_.5} parent=0 // pred_check_branch
    %272 = sbr.rel (0) target = $region33
  $region32: #{_lambda_.5} parent=0 // pred_region
    _
  $region33: #{_lambda_.5} parent=0 // pred_fallthru
    _
  // Predicated region
  $region34: #{_lambda_.5} parent=0 // pred_check
    _
  $region35: #{_lambda_.5} parent=0 // pred_check_branch
    %274 = sbr.rel (0) target = $region37
  $region36: #{_lambda_.5} parent=0 // pred_region
    _
  $region37: #{_lambda_.5} parent=0 // pred_fallthru
    _

// kernel: _lambda_.8
$region0: #{_lambda_.8}
  #allocation0 [shape = 'u32[]', space=smem, size = 0x4, offset = 0x4, fixed_abs, tag = 'smem constant byte address 0x4 - core index']
  #allocation1 [shape = 'u32[72,128]{1,0:T(1,128)}', space=vmem, size = 0x9000, scoped, tag = 'internal scratch']
  %s0 = inlined_call_operand.vmem [shape: f32[32,128], index: 0, kind: input, shape index: {}]
  %s1 = inlined_call_operand.vmem [shape: f32[1,128], index: 1, kind: input, shape index: {}]
  %s2 = inlined_call_operand.vmem [shape: f32[1,128], index: 2, kind: input, shape index: {}]
  %s3 = inlined_call_operand.vmem [shape: f32[1,128], index: 3, kind: input, shape index: {}]
  %s4 = inlined_call_operand.vmem [shape: f32[1,128], index: 4, kind: input, shape index: {}]
  %s5 = inlined_call_operand.vmem [shape: f32[32,128], index: 5, kind: output, shape index: {}]
  %s6 = sld [smem:[#allocation0]]
  $region30: #{_lambda_.8} parent=0
    _
  %s8 = ssub.s32 1, %s6
  %s9 = scalar_select 0, %s8, %s6
  // Predicated region
  $region2: #{_lambda_.8} parent=0 // pred_check
    _
  $region3: #{_lambda_.8} parent=0 // pred_check_branch
    %11 = sbr.rel (0) target = $region5
  $region4: #{_lambda_.8} parent=0 // pred_region
    _
  $region5: #{_lambda_.8} parent=0 // pred_fallthru
    _
  // Predicated region
  $region6: #{_lambda_.8} parent=0 // pred_check
    _
  $region7: #{_lambda_.8} parent=0 // pred_check_branch
    %13 = sbr.rel (0) target = $region9
  $region8: #{_lambda_.8} parent=0 // pred_region
    _
  $region9: #{_lambda_.8} parent=0 // pred_fallthru
    _
  // Predicated region
  $region10: #{_lambda_.8} parent=0 // pred_check
    _
  $region11: #{_lambda_.8} parent=0 // pred_check_branch
    %15 = sbr.rel (0) target = $region13
  $region12: #{_lambda_.8} parent=0 // pred_region
    _
  $region13: #{_lambda_.8} parent=0 // pred_fallthru
    _
  // Predicated region
  $region14: #{_lambda_.8} parent=0 // pred_check
    _
  $region15: #{_lambda_.8} parent=0 // pred_check_branch
    %17 = sbr.rel (0) target = $region17
  $region16: #{_lambda_.8} parent=0 // pred_region
    _
  $region17: #{_lambda_.8} parent=0 // pred_fallthru
    _
  // Predicated region
  $region18: #{_lambda_.8} parent=0 // pred_check
    _
  $region19: #{_lambda_.8} parent=0 // pred_check_branch
    %19 = sbr.rel (0) target = $region21
  $region20: #{_lambda_.8} parent=0 // pred_region
    _
  $region21: #{_lambda_.8} parent=0 // pred_fallthru
    _
  %v20 = vld [vmem:[%s1] sm:$0x1]
  %v21 = vmul.f32 %v20, 0.03125
  %v22 = vld [vmem:[%s2] sm:$0x1]
  %v23 = vmul.f32 %v22, 0.03125
  %v24 = vmul.f32 %v21, %v21
  %v25 = vsub.f32 %v23, %v24
  %v26 = vmax.f32 %v25, 0.0
  %v27 = vadd.f32 %v26, 1e-05
  %v28 = vrsqrt.pop %v27
  %v29 = vmul.f32 %v28, %v27
  %v30 = vmul.f32 %v29, %v28
  %v31 = vmul.f32 0.5, %v30
  %v32 = vsub.f32 1.5, %v31
  %v33 = vmul.f32 %v28, %v32
  %vm34 = vweird.f32 %v27
  %vm35 = vweird.f32 %v28
  %vm36 = vmor %vm34, %vm35
  %v37 = vsel %vm36, %v28, %v33
  %v38 = vld [vmem:[%s3] sm:$0x1]
  %v39 = vmul.f32 %v37, %v38
  %v40 = vld [vmem:[%s4] sm:$0x1]
  %v41 = vmul.f32 %v21, %v39
  %v42 = vsub.f32 %v40, %v41
  %v43 = vld [vmem:[%s0] sm:$0xff]
  %v44 = vld [vmem:[%s0 + $0x8] sm:$0xff]
  %v45 = vld [vmem:[%s0 + $0x10] sm:$0xff]
  %v46 = vld [vmem:[%s0 + $0x18] sm:$0xff]
  %v48 = vperm.slane %v39, 0
  %v50 = vmul.f32 %v43, %v48
  %v51 = vmul.f32 %v44, %v48
  %v52 = vmul.f32 %v45, %v48
  %v53 = vmul.f32 %v46, %v48
  %v55 = vperm.slane %v42, 0
  %v57 = vadd.f32 %v50, %v55
  %v58 = vadd.f32 %v51, %v55
  %v59 = vadd.f32 %v52, %v55
  %v60 = vadd.f32 %v53, %v55
  %vm61 = vcmp.gt.f32.partialorder %v57, 0.0
  %vm62 = vcmp.gt.f32.partialorder %v58, 0.0
  %vm63 = vcmp.gt.f32.partialorder %v59, 0.0
  %vm64 = vcmp.gt.f32.partialorder %v60, 0.0
  %v65 = vmul.f32 %v57, 0.2
  %v66 = vmul.f32 %v58, 0.2
  %v67 = vmul.f32 %v59, 0.2
  %v68 = vmul.f32 %v60, 0.2
  %v69 = vsel %vm61, %v57, %v65
  %v70 = vsel %vm62, %v58, %v66
  %v71 = vsel %vm63, %v59, %v67
  %v72 = vsel %vm64, %v60, %v68
  %73 = vst [vmem:[%s5] sm:$0xff] %v69
  %74 = vst [vmem:[%s5 + $0x8] sm:$0xff] %v70
  %75 = vst [vmem:[%s5 + $0x10] sm:$0xff] %v71
  %76 = vst [vmem:[%s5 + $0x18] sm:$0xff] %v72
  // Predicated region
  $region22: #{_lambda_.8} parent=0 // pred_check
    _
  $region23: #{_lambda_.8} parent=0 // pred_check_branch
    %78 = sbr.rel (0) target = $region25
  $region24: #{_lambda_.8} parent=0 // pred_region
    _
  $region25: #{_lambda_.8} parent=0 // pred_fallthru
    _
  // Predicated region
  $region26: #{_lambda_.8} parent=0 // pred_check
    _
  $region27: #{_lambda_.8} parent=0 // pred_check_branch
    %80 = sbr.rel (0) target = $region29
  $region28: #{_lambda_.8} parent=0 // pred_region
    _
  $region29: #{_lambda_.8} parent=0 // pred_fallthru
    _

// kernel: _lambda_.7
$region0: #{_lambda_.7}
  #allocation0 [shape = 'u32[]', space=smem, size = 0x4, offset = 0x4, fixed_abs, tag = 'smem constant byte address 0x4 - core index']
  #allocation1 [shape = 'u32[72,128]{1,0:T(1,128)}', space=vmem, size = 0x9000, scoped, tag = 'internal scratch']
  %s0 = inlined_call_operand.vmem [shape: bf16[32,256], index: 0, kind: input, shape index: {}]
  %s1 = inlined_call_operand.vmem [shape: bf16[256,128], index: 1, kind: input, shape index: {}]
  %s2 = inlined_call_operand.vmem [shape: f32[32,128], index: 2, kind: output, shape index: {0}]
  %s3 = inlined_call_operand.vmem [shape: f32[1,128], index: 3, kind: output, shape index: {1}]
  %s4 = inlined_call_operand.vmem [shape: f32[1,128], index: 4, kind: output, shape index: {2}]
  %5 = xla_tuple %s2, %s3, %s4
  %s6 = sld [smem:[#allocation0]]
  $region38: #{_lambda_.7} parent=0
    _
  %s8 = ssub.s32 1, %s6
  %s9 = scalar_select 0, %s8, %s6
  // Predicated region
  $region2: #{_lambda_.7} parent=0 // pred_check
    _
  $region3: #{_lambda_.7} parent=0 // pred_check_branch
    %11 = sbr.rel (0) target = $region5
  $region4: #{_lambda_.7} parent=0 // pred_region
    _
  $region5: #{_lambda_.7} parent=0 // pred_fallthru
    _
  // Predicated region
  $region6: #{_lambda_.7} parent=0 // pred_check
    _
  $region7: #{_lambda_.7} parent=0 // pred_check_branch
    %13 = sbr.rel (0) target = $region9
  $region8: #{_lambda_.7} parent=0 // pred_region
    _
  $region9: #{_lambda_.7} parent=0 // pred_fallthru
    _
  %p14 = scmp.eq.s32.totalorder 0, 0
  // Predicated region
  $region10: #{_lambda_.7} parent=0 // pred_check
    %p15 = pneg %p14
  $region11: #{_lambda_.7} parent=0 // pred_check_branch
    %17 = sbr.rel (%p15) target = $region13
  $region12: #{_lambda_.7} parent=0 // pred_region
    %18 = vst [vmem:[%s3] sm:$0x1] 0.0
    %19 = vst [vmem:[%s4] sm:$0x1] 0.0
  $region13: #{_lambda_.7} parent=0 // pred_fallthru
    _
  %v20 = vld [vmem:[%s0] sm:$0xff]
  %v21 = vld [vmem:[%s0 + $0x8] sm:$0xff]
  %v22 = vld [vmem:[%s0 + $0x10] sm:$0xff]
  %v23 = vld [vmem:[%s0 + $0x18] sm:$0xff]
  %v24 = vld [vmem:[%s1] sm:$0xf]
  %v25 = vld [vmem:[%s1 + $0x4] sm:$0xf]
  %v26 = vld [vmem:[%s1 + $0x8] sm:$0xf]
  %v27 = vld [vmem:[%s1 + $0xc] sm:$0xf]
  %v28 = vld [vmem:[%s1 + $0x10] sm:$0xf]
  %v29 = vld [vmem:[%s1 + $0x14] sm:$0xf]
  %v30 = vld [vmem:[%s1 + $0x18] sm:$0xf]
  %v31 = vld [vmem:[%s1 + $0x1c] sm:$0xf]
  %v32 = vld [vmem:[%s1 + $0x20] sm:$0xf]
  %v33 = vld [vmem:[%s1 + $0x24] sm:$0xf]
  %v34 = vld [vmem:[%s1 + $0x28] sm:$0xf]
  %v35 = vld [vmem:[%s1 + $0x2c] sm:$0xf]
  %v36 = vld [vmem:[%s1 + $0x30] sm:$0xf]
  %v37 = vld [vmem:[%s1 + $0x34] sm:$0xf]
  %v38 = vld [vmem:[%s1 + $0x38] sm:$0xf]
  %v39 = vld [vmem:[%s1 + $0x3c] sm:$0xf]
  %v40 = vld [vmem:[%s1 + $0x40] sm:$0xf]
  %v41 = vld [vmem:[%s1 + $0x44] sm:$0xf]
  %v42 = vld [vmem:[%s1 + $0x48] sm:$0xf]
  %v43 = vld [vmem:[%s1 + $0x4c] sm:$0xf]
  %v44 = vld [vmem:[%s1 + $0x50] sm:$0xf]
  %v45 = vld [vmem:[%s1 + $0x54] sm:$0xf]
  %v46 = vld [vmem:[%s1 + $0x58] sm:$0xf]
  %v47 = vld [vmem:[%s1 + $0x5c] sm:$0xf]
  %v48 = vld [vmem:[%s1 + $0x60] sm:$0xf]
  %v49 = vld [vmem:[%s1 + $0x64] sm:$0xf]
  %v50 = vld [vmem:[%s1 + $0x68] sm:$0xf]
  %v51 = vld [vmem:[%s1 + $0x6c] sm:$0xf]
  %v52 = vld [vmem:[%s1 + $0x70] sm:$0xf]
  %v53 = vld [vmem:[%s1 + $0x74] sm:$0xf]
  %v54 = vld [vmem:[%s1 + $0x78] sm:$0xf]
  %v55 = vld [vmem:[%s1 + $0x7c] sm:$0xf]
  %v60 = vunpack.c.l.b16 %v20
  %v61 = vunpack.c.h.b16 %v20
  %v62 = vunpack.c.l.b16 %v21
  %v63 = vunpack.c.h.b16 %v21
  %v64 = vunpack.c.l.b16 %v22
  %v65 = vunpack.c.h.b16 %v22
  %v66 = vunpack.c.l.b16 %v23
  %v67 = vunpack.c.h.b16 %v23
  %v68 = vpack.c.b16 %v62, %v60
  %v69 = vpack.c.b16 %v63, %v61
  %v70 = vpack.c.b16 %v66, %v64
  %v71 = vpack.c.b16 %v67, %v65
  %v108 = vunpack.c.l.b16 %v24
  %v109 = vunpack.c.l.b16 %v25
  %v110 = vunpack.c.l.b16 %v26
  %v111 = vunpack.c.l.b16 %v27
  %v112 = vunpack.c.l.b16 %v28
  %v113 = vunpack.c.l.b16 %v29
  %v114 = vunpack.c.l.b16 %v30
  %v115 = vunpack.c.l.b16 %v31
  %v116 = vunpack.c.l.b16 %v32
  %v117 = vunpack.c.l.b16 %v33
  %v118 = vunpack.c.l.b16 %v34
  %v119 = vunpack.c.l.b16 %v35
  %v120 = vunpack.c.l.b16 %v36
  %v121 = vunpack.c.l.b16 %v37
  %v122 = vunpack.c.l.b16 %v38
  %v123 = vunpack.c.l.b16 %v39
  %v124 = vunpack.c.l.b16 %v40
  %v125 = vunpack.c.l.b16 %v41
  %v126 = vunpack.c.l.b16 %v42
  %v127 = vunpack.c.l.b16 %v43
  %v128 = vunpack.c.l.b16 %v44
  %v129 = vunpack.c.l.b16 %v45
  %v130 = vunpack.c.l.b16 %v46
  %v131 = vunpack.c.l.b16 %v47
  %v132 = vunpack.c.l.b16 %v48
  %v133 = vunpack.c.l.b16 %v49
  %v134 = vunpack.c.l.b16 %v50
  %v135 = vunpack.c.l.b16 %v51
  %v136 = vunpack.c.l.b16 %v52
  %v137 = vunpack.c.l.b16 %v53
  %v138 = vunpack.c.l.b16 %v54
  %v139 = vunpack.c.l.b16 %v55
  %v140 = vpack.c.b16 %v109, %v108
  %v141 = vpack.c.b16 %v111, %v110
  %v142 = vpack.c.b16 %v113, %v112
  %v143 = vpack.c.b16 %v115, %v114
  %v144 = vpack.c.b16 %v117, %v116
  %v145 = vpack.c.b16 %v119, %v118
  %v146 = vpack.c.b16 %v121, %v120
  %v147 = vpack.c.b16 %v123, %v122
  %v148 = vpack.c.b16 %v125, %v124
  %v149 = vpack.c.b16 %v127, %v126
  %v150 = vpack.c.b16 %v129, %v128
  %v151 = vpack.c.b16 %v131, %v130
  %v152 = vpack.c.b16 %v133, %v132
  %v153 = vpack.c.b16 %v135, %v134
  %v154 = vpack.c.b16 %v137, %v136
  %v155 = vpack.c.b16 %v139, %v138
  %172 = vmatpush.bf16.msra.mxu0 %v147
  %173 = vmatpush.bf16.msra.mxu0 %v146
  %174 = vmatpush.bf16.msra.mxu0 %v145
  %175 = vmatpush.bf16.msra.mxu0 %v144
  %176 = vmatpush.bf16.msra.mxu0 %v143
  %177 = vmatpush.bf16.msra.mxu0 %v142
  %178 = vmatpush.bf16.msra.mxu0 %v141
  %179 = vmatpush.bf16.msra.mxu0 %v140
  %180 = vmatmul.bf16.gmra.mxu0 %v68
  %v181 = vpop.f32.mrf.mxu0
  %v182 = vadd.f32 0.0, %v181
  %v183 = vpop.f32.mrf.mxu0
  %v184 = vadd.f32 0.0, %v183
  %185 = vmatmul.bf16.gmra.mxu0 %v70
  %v186 = vpop.f32.mrf.mxu0
  %v187 = vadd.f32 0.0, %v186
  %v188 = vpop.f32.mrf.mxu0
  %v189 = vadd.f32 0.0, %v188
  %190 = vdwg.mxu0
  %191 = vmatpush.bf16.msra.mxu0 %v155
  %192 = vmatpush.bf16.msra.mxu0 %v154
  %193 = vmatpush.bf16.msra.mxu0 %v153
  %194 = vmatpush.bf16.msra.mxu0 %v152
  %195 = vmatpush.bf16.msra.mxu0 %v151
  %196 = vmatpush.bf16.msra.mxu0 %v150
  %197 = vmatpush.bf16.msra.mxu0 %v149
  %198 = vmatpush.bf16.msra.mxu0 %v148
  %199 = vmatmul.bf16.gmra.mxu0 %v69
  %v200 = vpop.f32.mrf.mxu0
  %v201 = vadd.f32 %v182, %v200
  %v202 = vpop.f32.mrf.mxu0
  %v203 = vadd.f32 %v184, %v202
  %204 = vmatmul.bf16.gmra.mxu0 %v71
  %v205 = vpop.f32.mrf.mxu0
  %v206 = vadd.f32 %v187, %v205
  %v207 = vpop.f32.mrf.mxu0
  %v208 = vadd.f32 %v189, %v207
  %209 = vdwg.mxu0
  %210 = vst [vmem:[%s2] sm:$0xff] %v201
  %211 = vst [vmem:[%s2 + $0x8] sm:$0xff] %v203
  %212 = vst [vmem:[%s2 + $0x10] sm:$0xff] %v206
  %213 = vst [vmem:[%s2 + $0x18] sm:$0xff] %v208
  %v214 = vld [vmem:[%s3] sm:$0x1]
  %v215 = vadd.f32 %v201, %v203
  %v216 = vadd.f32 %v215, %v206
  %v217 = vadd.f32 %v216, %v208
  %v218 = vrot.slane %v217, 4
  %v219 = vadd.f32 %v217, %v218
  %v220 = vrot.slane %v219, 2
  %v221 = vadd.f32 %v219, %v220
  %v222 = vrot.slane %v221, 1
  %v223 = vadd.f32 %v221, %v222
  %v224 = vadd.f32 %v214, %v223
  %225 = vst [vmem:[%s3] sm:$0x1] %v224
  %v226 = vld [vmem:[%s4] sm:$0x1]
  %v227 = vmul.f32 %v201, %v201
  %v228 = vmul.f32 %v203, %v203
  %v229 = vmul.f32 %v206, %v206
  %v230 = vmul.f32 %v208, %v208
  %v231 = vadd.f32 %v227, %v228
  %v232 = vadd.f32 %v231, %v229
  %v233 = vadd.f32 %v232, %v230
  %v234 = vrot.slane %v233, 4
  %v235 = vadd.f32 %v233, %v234
  %v236 = vrot.slane %v235, 2
  %v237 = vadd.f32 %v235, %v236
  %v238 = vrot.slane %v237, 1
  %v239 = vadd.f32 %v237, %v238
  %v240 = vadd.f32 %v226, %v239
  %241 = vst [vmem:[%s4] sm:$0x1] %v240
  // Predicated region
  $region14: #{_lambda_.7} parent=0 // pred_check
    _
  $region15: #{_lambda_.7} parent=0 // pred_check_branch
    %243 = sbr.rel (0) target = $region17
  $region16: #{_lambda_.7} parent=0 // pred_region
    _
  $region17: #{_lambda_.7} parent=0 // pred_fallthru
    _
  // Predicated region
  $region18: #{_lambda_.7} parent=0 // pred_check
    _
  $region19: #{_lambda_.7} parent=0 // pred_check_branch
    %245 = sbr.rel (0) target = $region21
  $region20: #{_lambda_.7} parent=0 // pred_region
    _
  $region21: #{_lambda_.7} parent=0 // pred_fallthru
    _
  // Predicated region
  $region22: #{_lambda_.7} parent=0 // pred_check
    _
  $region23: #{_lambda_.7} parent=0 // pred_check_branch
    %247 = sbr.rel (0) target = $region25
  $region24: #{_lambda_.7} parent=0 // pred_region
    _
  $region25: #{_lambda_.7} parent=0 // pred_fallthru
    _
  // Predicated region
  $region26: #{_lambda_.7} parent=0 // pred_check
    _
  $region27: #{_lambda_.7} parent=0 // pred_check_branch
    %249 = sbr.rel (0) target = $region29
  $region28: #{_lambda_.7} parent=0 // pred_region
    _
  $region29: #{_lambda_.7} parent=0 // pred_fallthru
    _
  // Predicated region
  $region30: #{_lambda_.7} parent=0 // pred_check
    _
  $region31: #{_lambda_.7} parent=0 // pred_check_branch
    %251 = sbr.rel (0) target = $region33
  $region32: #{_lambda_.7} parent=0 // pred_region
    _
  $region33: #{_lambda_.7} parent=0 // pred_fallthru
    _
  // Predicated region
  $region34: #{_lambda_.7} parent=0 // pred_check
    _
  $region35: #{_lambda_.7} parent=0 // pred_check_branch
    %253 = sbr.rel (0) target = $region37
  $region36: #{_lambda_.7} parent=0 // pred_region
    _
  $region37: #{_lambda_.7} parent=0 // pred_fallthru
    _

// kernel: _lambda_.9
$region0: #{_lambda_.9}
  #allocation0 [shape = 'u32[]', space=smem, size = 0x4, offset = 0x4, fixed_abs, tag = 'smem constant byte address 0x4 - core index']
  #allocation1 [shape = 'u32[72,128]{1,0:T(1,128)}', space=vmem, size = 0x9000, scoped, tag = 'internal scratch']
  %s0 = inlined_call_operand.vmem [shape: bf16[16,512], index: 0, kind: input, shape index: {}]
  %s1 = inlined_call_operand.vmem [shape: bf16[512,128], index: 1, kind: input, shape index: {}]
  %s2 = inlined_call_operand.vmem [shape: f32[1,128], index: 2, kind: input, shape index: {}]
  %s3 = inlined_call_operand.vmem [shape: f32[16,128], index: 3, kind: output, shape index: {}]
  %s4 = sld [smem:[#allocation0]]
  $region22: #{_lambda_.9} parent=0
    _
  %s6 = ssub.s32 1, %s4
  %s7 = scalar_select 0, %s6, %s4
  // Predicated region
  $region2: #{_lambda_.9} parent=0 // pred_check
    _
  $region3: #{_lambda_.9} parent=0 // pred_check_branch
    %9 = sbr.rel (0) target = $region5
  $region4: #{_lambda_.9} parent=0 // pred_region
    _
  $region5: #{_lambda_.9} parent=0 // pred_fallthru
    _
  // Predicated region
  $region6: #{_lambda_.9} parent=0 // pred_check
    _
  $region7: #{_lambda_.9} parent=0 // pred_check_branch
    %11 = sbr.rel (0) target = $region9
  $region8: #{_lambda_.9} parent=0 // pred_region
    _
  $region9: #{_lambda_.9} parent=0 // pred_fallthru
    _
  // Predicated region
  $region10: #{_lambda_.9} parent=0 // pred_check
    _
  $region11: #{_lambda_.9} parent=0 // pred_check_branch
    %13 = sbr.rel (0) target = $region13
  $region12: #{_lambda_.9} parent=0 // pred_region
    _
  $region13: #{_lambda_.9} parent=0 // pred_fallthru
    _
  %v14 = vld [vmem:[%s0] sm:$0xff]
  %v15 = vld [vmem:[%s0 + $0x8] sm:$0xff]
  %v16 = vld [vmem:[%s0 + $0x10] sm:$0xff]
  %v17 = vld [vmem:[%s0 + $0x18] sm:$0xff]
  %v18 = vld [vmem:[%s1] sm:$0xf]
  %v19 = vld [vmem:[%s1 + $0x4] sm:$0xf]
  %v20 = vld [vmem:[%s1 + $0x8] sm:$0xf]
  %v21 = vld [vmem:[%s1 + $0xc] sm:$0xf]
  %v22 = vld [vmem:[%s1 + $0x10] sm:$0xf]
  %v23 = vld [vmem:[%s1 + $0x14] sm:$0xf]
  %v24 = vld [vmem:[%s1 + $0x18] sm:$0xf]
  %v25 = vld [vmem:[%s1 + $0x1c] sm:$0xf]
  %v26 = vld [vmem:[%s1 + $0x20] sm:$0xf]
  %v27 = vld [vmem:[%s1 + $0x24] sm:$0xf]
  %v28 = vld [vmem:[%s1 + $0x28] sm:$0xf]
  %v29 = vld [vmem:[%s1 + $0x2c] sm:$0xf]
  %v30 = vld [vmem:[%s1 + $0x30] sm:$0xf]
  %v31 = vld [vmem:[%s1 + $0x34] sm:$0xf]
  %v32 = vld [vmem:[%s1 + $0x38] sm:$0xf]
  %v33 = vld [vmem:[%s1 + $0x3c] sm:$0xf]
  %v34 = vld [vmem:[%s1 + $0x40] sm:$0xf]
  %v35 = vld [vmem:[%s1 + $0x44] sm:$0xf]
  %v36 = vld [vmem:[%s1 + $0x48] sm:$0xf]
  %v37 = vld [vmem:[%s1 + $0x4c] sm:$0xf]
  %v38 = vld [vmem:[%s1 + $0x50] sm:$0xf]
  %v39 = vld [vmem:[%s1 + $0x54] sm:$0xf]
  %v40 = vld [vmem:[%s1 + $0x58] sm:$0xf]
  %v41 = vld [vmem:[%s1 + $0x5c] sm:$0xf]
  %v42 = vld [vmem:[%s1 + $0x60] sm:$0xf]
  %v43 = vld [vmem:[%s1 + $0x64] sm:$0xf]
  %v44 = vld [vmem:[%s1 + $0x68] sm:$0xf]
  %v45 = vld [vmem:[%s1 + $0x6c] sm:$0xf]
  %v46 = vld [vmem:[%s1 + $0x70] sm:$0xf]
  %v47 = vld [vmem:[%s1 + $0x74] sm:$0xf]
  %v48 = vld [vmem:[%s1 + $0x78] sm:$0xf]
  %v49 = vld [vmem:[%s1 + $0x7c] sm:$0xf]
  %v50 = vld [vmem:[%s1 + $0x80] sm:$0xf]
  %v51 = vld [vmem:[%s1 + $0x84] sm:$0xf]
  %v52 = vld [vmem:[%s1 + $0x88] sm:$0xf]
  %v53 = vld [vmem:[%s1 + $0x8c] sm:$0xf]
  %v54 = vld [vmem:[%s1 + $0x90] sm:$0xf]
  %v55 = vld [vmem:[%s1 + $0x94] sm:$0xf]
  %v56 = vld [vmem:[%s1 + $0x98] sm:$0xf]
  %v57 = vld [vmem:[%s1 + $0x9c] sm:$0xf]
  %v58 = vld [vmem:[%s1 + $0xa0] sm:$0xf]
  %v59 = vld [vmem:[%s1 + $0xa4] sm:$0xf]
  %v60 = vld [vmem:[%s1 + $0xa8] sm:$0xf]
  %v61 = vld [vmem:[%s1 + $0xac] sm:$0xf]
  %v62 = vld [vmem:[%s1 + $0xb0] sm:$0xf]
  %v63 = vld [vmem:[%s1 + $0xb4] sm:$0xf]
  %v64 = vld [vmem:[%s1 + $0xb8] sm:$0xf]
  %v65 = vld [vmem:[%s1 + $0xbc] sm:$0xf]
  %v66 = vld [vmem:[%s1 + $0xc0] sm:$0xf]
  %v67 = vld [vmem:[%s1 + $0xc4] sm:$0xf]
  %v68 = vld [vmem:[%s1 + $0xc8] sm:$0xf]
  %v69 = vld [vmem:[%s1 + $0xcc] sm:$0xf]
  %v70 = vld [vmem:[%s1 + $0xd0] sm:$0xf]
  %v71 = vld [vmem:[%s1 + $0xd4] sm:$0xf]
  %v72 = vld [vmem:[%s1 + $0xd8] sm:$0xf]
  %v73 = vld [vmem:[%s1 + $0xdc] sm:$0xf]
  %v74 = vld [vmem:[%s1 + $0xe0] sm:$0xf]
  %v75 = vld [vmem:[%s1 + $0xe4] sm:$0xf]
  %v76 = vld [vmem:[%s1 + $0xe8] sm:$0xf]
  %v77 = vld [vmem:[%s1 + $0xec] sm:$0xf]
  %v78 = vld [vmem:[%s1 + $0xf0] sm:$0xf]
  %v79 = vld [vmem:[%s1 + $0xf4] sm:$0xf]
  %v80 = vld [vmem:[%s1 + $0xf8] sm:$0xf]
  %v81 = vld [vmem:[%s1 + $0xfc] sm:$0xf]
  %v82 = vld [vmem:[%s2] sm:$0x1]
  %v84 = vperm.slane %v82, 0
  %v90 = vunpack.c.l.b16 %v14
  %v91 = vunpack.c.h.b16 %v14
  %v92 = vunpack.c.l.b16 %v15
  %v93 = vunpack.c.h.b16 %v15
  %v94 = vunpack.c.l.b16 %v16
  %v95 = vunpack.c.h.b16 %v16
  %v96 = vunpack.c.l.b16 %v17
  %v97 = vunpack.c.h.b16 %v17
  %v98 = vpack.c.b16 %v94, %v90
  %v99 = vpack.c.b16 %v95, %v91
  %v100 = vpack.c.b16 %v96, %v92
  %v101 = vpack.c.b16 %v97, %v93
  %v170 = vunpack.c.l.b16 %v18
  %v171 = vunpack.c.l.b16 %v19
  %v172 = vunpack.c.l.b16 %v20
  %v173 = vunpack.c.l.b16 %v21
  %v174 = vunpack.c.l.b16 %v22
  %v175 = vunpack.c.l.b16 %v23
  %v176 = vunpack.c.l.b16 %v24
  %v177 = vunpack.c.l.b16 %v25
  %v178 = vunpack.c.l.b16 %v26
  %v179 = vunpack.c.l.b16 %v27
  %v180 = vunpack.c.l.b16 %v28
  %v181 = vunpack.c.l.b16 %v29
  %v182 = vunpack.c.l.b16 %v30
  %v183 = vunpack.c.l.b16 %v31
  %v184 = vunpack.c.l.b16 %v32
  %v185 = vunpack.c.l.b16 %v33
  %v186 = vunpack.c.l.b16 %v34
  %v187 = vunpack.c.l.b16 %v35
  %v188 = vunpack.c.l.b16 %v36
  %v189 = vunpack.c.l.b16 %v37
  %v190 = vunpack.c.l.b16 %v38
  %v191 = vunpack.c.l.b16 %v39
  %v192 = vunpack.c.l.b16 %v40
  %v193 = vunpack.c.l.b16 %v41
  %v194 = vunpack.c.l.b16 %v42
  %v195 = vunpack.c.l.b16 %v43
  %v196 = vunpack.c.l.b16 %v44
  %v197 = vunpack.c.l.b16 %v45
  %v198 = vunpack.c.l.b16 %v46
  %v199 = vunpack.c.l.b16 %v47
  %v200 = vunpack.c.l.b16 %v48
  %v201 = vunpack.c.l.b16 %v49
  %v202 = vunpack.c.l.b16 %v50
  %v203 = vunpack.c.l.b16 %v51
  %v204 = vunpack.c.l.b16 %v52
  %v205 = vunpack.c.l.b16 %v53
  %v206 = vunpack.c.l.b16 %v54
  %v207 = vunpack.c.l.b16 %v55
  %v208 = vunpack.c.l.b16 %v56
  %v209 = vunpack.c.l.b16 %v57
  %v210 = vunpack.c.l.b16 %v58
  %v211 = vunpack.c.l.b16 %v59
  %v212 = vunpack.c.l.b16 %v60
  %v213 = vunpack.c.l.b16 %v61
  %v214 = vunpack.c.l.b16 %v62
  %v215 = vunpack.c.l.b16 %v63
  %v216 = vunpack.c.l.b16 %v64
  %v217 = vunpack.c.l.b16 %v65
  %v218 = vunpack.c.l.b16 %v66
  %v219 = vunpack.c.l.b16 %v67
  %v220 = vunpack.c.l.b16 %v68
  %v221 = vunpack.c.l.b16 %v69
  %v222 = vunpack.c.l.b16 %v70
  %v223 = vunpack.c.l.b16 %v71
  %v224 = vunpack.c.l.b16 %v72
  %v225 = vunpack.c.l.b16 %v73
  %v226 = vunpack.c.l.b16 %v74
  %v227 = vunpack.c.l.b16 %v75
  %v228 = vunpack.c.l.b16 %v76
  %v229 = vunpack.c.l.b16 %v77
  %v230 = vunpack.c.l.b16 %v78
  %v231 = vunpack.c.l.b16 %v79
  %v232 = vunpack.c.l.b16 %v80
  %v233 = vunpack.c.l.b16 %v81
  %v234 = vpack.c.b16 %v171, %v170
  %v235 = vpack.c.b16 %v173, %v172
  %v236 = vpack.c.b16 %v175, %v174
  %v237 = vpack.c.b16 %v177, %v176
  %v238 = vpack.c.b16 %v179, %v178
  %v239 = vpack.c.b16 %v181, %v180
  %v240 = vpack.c.b16 %v183, %v182
  %v241 = vpack.c.b16 %v185, %v184
  %v242 = vpack.c.b16 %v187, %v186
  %v243 = vpack.c.b16 %v189, %v188
  %v244 = vpack.c.b16 %v191, %v190
  %v245 = vpack.c.b16 %v193, %v192
  %v246 = vpack.c.b16 %v195, %v194
  %v247 = vpack.c.b16 %v197, %v196
  %v248 = vpack.c.b16 %v199, %v198
  %v249 = vpack.c.b16 %v201, %v200
  %v250 = vpack.c.b16 %v203, %v202
  %v251 = vpack.c.b16 %v205, %v204
  %v252 = vpack.c.b16 %v207, %v206
  %v253 = vpack.c.b16 %v209, %v208
  %v254 = vpack.c.b16 %v211, %v210
  %v255 = vpack.c.b16 %v213, %v212
  %v256 = vpack.c.b16 %v215, %v214
  %v257 = vpack.c.b16 %v217, %v216
  %v258 = vpack.c.b16 %v219, %v218
  %v259 = vpack.c.b16 %v221, %v220
  %v260 = vpack.c.b16 %v223, %v222
  %v261 = vpack.c.b16 %v225, %v224
  %v262 = vpack.c.b16 %v227, %v226
  %v263 = vpack.c.b16 %v229, %v228
  %v264 = vpack.c.b16 %v231, %v230
  %v265 = vpack.c.b16 %v233, %v232
  %298 = vmatpush.bf16.msra.mxu0 %v241
  %299 = vmatpush.bf16.msra.mxu0 %v240
  %300 = vmatpush.bf16.msra.mxu0 %v239
  %301 = vmatpush.bf16.msra.mxu0 %v238
  %302 = vmatpush.bf16.msra.mxu0 %v237
  %303 = vmatpush.bf16.msra.mxu0 %v236
  %304 = vmatpush.bf16.msra.mxu0 %v235
  %305 = vmatpush.bf16.msra.mxu0 %v234
  %306 = vmatmul.bf16.gmra.mxu0 %v98
  %v307 = vpop.f32.mrf.mxu0
  %v308 = vadd.f32 %v84, %v307
  %v309 = vpop.f32.mrf.mxu0
  %v310 = vadd.f32 %v84, %v309
  %311 = vdwg.mxu0
  %312 = vmatpush.bf16.msra.mxu0 %v249
  %313 = vmatpush.bf16.msra.mxu0 %v248
  %314 = vmatpush.bf16.msra.mxu0 %v247
  %315 = vmatpush.bf16.msra.mxu0 %v246
  %316 = vmatpush.bf16.msra.mxu0 %v245
  %317 = vmatpush.bf16.msra.mxu0 %v244
  %318 = vmatpush.bf16.msra.mxu0 %v243
  %319 = vmatpush.bf16.msra.mxu0 %v242
  %320 = vmatmul.bf16.gmra.mxu0 %v99
  %v321 = vpop.f32.mrf.mxu0
  %v322 = vadd.f32 %v308, %v321
  %v323 = vpop.f32.mrf.mxu0
  %v324 = vadd.f32 %v310, %v323
  %325 = vdwg.mxu0
  %326 = vmatpush.bf16.msra.mxu0 %v257
  %327 = vmatpush.bf16.msra.mxu0 %v256
  %328 = vmatpush.bf16.msra.mxu0 %v255
  %329 = vmatpush.bf16.msra.mxu0 %v254
  %330 = vmatpush.bf16.msra.mxu0 %v253
  %331 = vmatpush.bf16.msra.mxu0 %v252
  %332 = vmatpush.bf16.msra.mxu0 %v251
  %333 = vmatpush.bf16.msra.mxu0 %v250
  %334 = vmatmul.bf16.gmra.mxu0 %v100
  %v335 = vpop.f32.mrf.mxu0
  %v336 = vadd.f32 %v322, %v335
  %v337 = vpop.f32.mrf.mxu0
  %v338 = vadd.f32 %v324, %v337
  %339 = vdwg.mxu0
  %340 = vmatpush.bf16.msra.mxu0 %v265
  %341 = vmatpush.bf16.msra.mxu0 %v264
  %342 = vmatpush.bf16.msra.mxu0 %v263
  %343 = vmatpush.bf16.msra.mxu0 %v262
  %344 = vmatpush.bf16.msra.mxu0 %v261
  %345 = vmatpush.bf16.msra.mxu0 %v260
  %346 = vmatpush.bf16.msra.mxu0 %v259
  %347 = vmatpush.bf16.msra.mxu0 %v258
  %348 = vmatmul.bf16.gmra.mxu0 %v101
  %v349 = vpop.f32.mrf.mxu0
  %v350 = vadd.f32 %v336, %v349
  %v351 = vpop.f32.mrf.mxu0
  %v352 = vadd.f32 %v338, %v351
  %353 = vdwg.mxu0
  %v354 = vsub.f32 0.0, %v350
  %v355 = vsub.f32 0.0, %v352
  %v356 = vmul.f32 %v354, 1.442695
  %v357 = vpow.pop %v356
  %v358 = vmul.f32 %v355, 1.442695
  %v359 = vpow.pop %v358
  %v360 = vadd.f32 %v357, 1.0
  %v361 = vadd.f32 %v359, 1.0
  %v362 = vrcp.pop %v360
  %v363 = vmul.f32 %v360, %v362
  %v364 = vsub.f32 1.0, %v363
  %v365 = vmul.f32 %v362, %v364
  %v366 = vadd.f32 %v362, %v365
  %vm367 = vweird.f32 %v360
  %vm368 = vweird.f32 %v362
  %vm369 = vmor %vm367, %vm368
  %v370 = vsel %vm369, %v362, %v366
  %v371 = vand.u32 2147483647, %v360
  %vm372 = vcmp.eq.f32.partialorder %v371, 8.507059e+37
  %v373 = vand.u32 %v360, 2147483648
  %v374 = vor.u32 1.1754944e-38, %v373
  %v375 = vsel %vm372, %v374, %v370
  %v376 = vmul.f32 1.0, %v375
  %v377 = vrcp.pop %v361
  %v378 = vmul.f32 %v361, %v377
  %v379 = vsub.f32 1.0, %v378
  %v380 = vmul.f32 %v377, %v379
  %v381 = vadd.f32 %v377, %v380
  %vm382 = vweird.f32 %v361
  %vm383 = vweird.f32 %v377
  %vm384 = vmor %vm382, %vm383
  %v385 = vsel %vm384, %v377, %v381
  %v386 = vand.u32 2147483647, %v361
  %vm387 = vcmp.eq.f32.partialorder %v386, 8.507059e+37
  %v388 = vand.u32 %v361, 2147483648
  %v389 = vor.u32 1.1754944e-38, %v388
  %v390 = vsel %vm387, %v389, %v385
  %v391 = vmul.f32 1.0, %v390
  %392 = vst [vmem:[%s3] sm:$0xff] %v376
  %393 = vst [vmem:[%s3 + $0x8] sm:$0xff] %v391
  // Predicated region
  $region14: #{_lambda_.9} parent=0 // pred_check
    _
  $region15: #{_lambda_.9} parent=0 // pred_check_branch
    %395 = sbr.rel (0) target = $region17
  $region16: #{_lambda_.9} parent=0 // pred_region
    _
  $region17: #{_lambda_.9} parent=0 // pred_fallthru
    _
  // Predicated region
  $region18: #{_lambda_.9} parent=0 // pred_check
    _
  $region19: #{_lambda_.9} parent=0 // pred_check_branch
    %397 = sbr.rel (0) target = $region21
  $region20: #{_lambda_.9} parent=0 // pred_region
    _
  $region21: #{_lambda_.9} parent=0 // pred_fallthru
    _

</llo_original>
